<compile_context>
chip_gen: v7x
topology: tpu7x:2x2x1
jax: 0.10.0
libtpu: 0.0.40
codegen_flags: <defaults>
</compile_context>

<pallas_src>
import math
import functools

import jax
import jax.numpy as jnp
from jax import lax
from jax.experimental import pallas as pl
from jax.experimental.pallas import tpu as pltpu


# --------------------------------------------------------------------------
# hardware-aware defaults
# --------------------------------------------------------------------------
def _chip_vmem_bytes():
    try:
        return int(pltpu.get_tpu_info().vmem_capacity_bytes)
    except Exception:
        return None


def _default_q_tile(S):
    cap = _chip_vmem_bytes()
    # v7x (64 MiB VMEM) -> smaller score tiles; v5e/v6e (128 MiB) -> 256.
    base = 128 if (cap is not None and cap <= 96 * 2 ** 20) else 256
    return min(S, base)


def _vmem_limit_bytes(S, D, q_tile, cmp_bytes, self_attn):
    cap = _chip_vmem_bytes()
    if cap is None:
        return None  # fall back to the compiler's default scoped limit
    f32b = 4
    if self_attn:
        block_bytes = 2 * S * D * cmp_bytes                       # x block (dbl-buffered)
    else:
        block_bytes = (2 * q_tile * D + 2 * 2 * S * D) * cmp_bytes  # q + k + v blocks
    block_bytes += 2 * 2 * D * D * cmp_bytes + 2 * 2 * D * f32b     # weights + biases
    block_bytes += 2 * q_tile * D * f32b                            # output block
    scratch_bytes = (1 if self_attn else 2) * S * D * cmp_bytes     # cached K/V
    interm_bytes = (2 * S * D + 4 * q_tile * D + 3 * q_tile * S) * f32b
    need = block_bytes + scratch_bytes + interm_bytes
    return int(min(max(2 * need, 32 * 2 ** 20), int(0.75 * cap)))


# --------------------------------------------------------------------------
# kernel bodies
# --------------------------------------------------------------------------
def _attention_heads(q_f32, k_all, v_all, *, num_heads, d_k, compute_dtype, approx):
    """q_f32: (Tq, D) f32, pre-scaled.  k_all / v_all: (S, D) in compute dtype.
    Returns the (Tq, D) per-head attention outputs, heads concatenated."""
    f32 = jnp.float32
    qc = q_f32.astype(compute_dtype)
    dn_qk = (((1,), (1,)), ((), ()))   # contract d_k of both operands (trans_b)
    dn_pv = (((1,), (0,)), ((), ()))
    ctxs = []
    for h in range(num_heads):
        sl = slice(h * d_k, (h + 1) * d_k)
        scores = lax.dot_general(qc[:, sl], k_all[:, sl], dn_qk,
                                 preferred_element_type=f32)        # (Tq, S)
        # numerically stable softmax; normalization deferred past the PV matmul
        m = jnp.max(scores, axis=-1, keepdims=True)
        e = jnp.exp(scores - m)
        denom = jnp.sum(e, axis=-1, keepdims=True)                  # (Tq, 1)
        ctx = lax.dot_general(e.astype(compute_dtype), v_all[:, sl], dn_pv,
                              preferred_element_type=f32)           # (Tq, d_k)
        ctxs.append(ctx * pl.reciprocal(denom, approx=approx))
    # Single lane-dense (Tq, D) value feeding the output matmul -- no per-head
    # masked stores into a scratch buffer.
    return jnp.concatenate(ctxs, axis=-1).astype(compute_dtype)


def _mha_kernel(xq_ref, xk_ref, xv_ref, wq_ref, bq_ref, wo_ref, bo_ref,
                o_ref, k_scratch, v_scratch,
                *, num_heads, d_k, scale, compute_dtype, approx):
    """Grid step (batch b, query-tile t) -- distinct query / key / value."""
    f32 = jnp.float32
    t = pl.program_id(1)

    # Project K and V only once per batch row; cache them (compute dtype) in
    # persistent VMEM scratch for all following query tiles (axis 1 arbitrary).
    @pl.when(t == 0)
    def _():
        wq = wq_ref[...]
        bq = bq_ref[...].astype(f32)
        k_scratch[...] = (jnp.dot(xk_ref[0], wq, preferred_element_type=f32)
                          + bq).astype(k_scratch.dtype)
        v_scratch[...] = (jnp.dot(xv_ref[0], wq, preferred_element_type=f32)
                          + bq).astype(v_scratch.dtype)

    # Per-tile Q projection; fold 1/sqrt(d_k) into q once.
    q = (jnp.dot(xq_ref[0], wq_ref[...], preferred_element_type=f32)
         + bq_ref[...].astype(f32)) * scale

    attn = _attention_heads(q, k_scratch[...], v_scratch[...],
                            num_heads=num_heads, d_k=d_k,
                            compute_dtype=compute_dtype, approx=approx)

    out = jnp.dot(attn, wo_ref[...], preferred_element_type=f32) + bo_ref[...].astype(f32)
    o_ref[0] = out.astype(o_ref.dtype)


def _mha_self_kernel(x_ref, wq_ref, bq_ref, wo_ref, bo_ref,
                     o_ref, kv_scratch,
                     *, num_heads, d_k, scale, q_tile, compute_dtype, approx):
    """Self-attention fast path (query is key is value): one input, one
    projection per batch row; q / k / v all read from the cached projection."""
    f32 = jnp.float32
    t = pl.program_id(1)

    @pl.when(t == 0)
    def _():
        kv_scratch[...] = (jnp.dot(x_ref[0], wq_ref[...], preferred_element_type=f32)
                           + bq_ref[...].astype(f32)).astype(kv_scratch.dtype)

    row = pl.multiple_of(t * q_tile, q_tile)
    q = kv_scratch[pl.ds(row, q_tile), :].astype(f32) * scale

    attn = _attention_heads(q, kv_scratch[...], kv_scratch[...],
                            num_heads=num_heads, d_k=d_k,
                            compute_dtype=compute_dtype, approx=approx)

    out = jnp.dot(attn, wo_ref[...], preferred_element_type=f32) + bo_ref[...].astype(f32)
    o_ref[0] = out.astype(o_ref.dtype)


# --------------------------------------------------------------------------
# wrapper
# --------------------------------------------------------------------------
def multi_head_attention(query, key, value, params, *, num_heads,
                         q_tile=None, compute_dtype=jnp.bfloat16):
    """query/key/value: (B, S, d_model). params: weights stored (in, out) + biases."""
    B, S, D = query.shape
    assert D % num_heads == 0
    d_k = D // num_heads
    out_dtype = query.dtype
    scale = 1.0 / math.sqrt(d_k)
    self_attn = (query is key) and (key is value)
    approx = compute_dtype != jnp.float32

    # query-tile size (second grid axis); must divide S and be sublane-aligned.
    if q_tile is None:
        q_tile = _default_q_tile(S)
    q_tile = min(q_tile, S)
    if S % q_tile != 0 or (q_tile != S and q_tile % 8 != 0):
        q_tile = S
    nq = S // q_tile

    wq = params["wq"]                          # (D, D): y = x @ W + b
    wo = params["wo"]
    bq = params["bq"].reshape(1, D).astype(jnp.float32)   # biases stay f32
    bo = params["bo"].reshape(1, D).astype(jnp.float32)

    # bf16 fast path: pre-cast the DMA'd operands (halves HBM traffic + VMEM
    # residency and removes per-step in-kernel repack work).
    if compute_dtype != query.dtype:
        query = query.astype(compute_dtype)
        if not self_attn:
            key = key.astype(compute_dtype)
            value = value.astype(compute_dtype)
        wq = wq.astype(compute_dtype)
        wo = wo.astype(compute_dtype)

    cmp_bytes = jnp.dtype(compute_dtype).itemsize
    vmem_limit = _vmem_limit_bytes(S, D, q_tile, cmp_bytes, self_attn)

    w_spec = pl.BlockSpec((D, D), lambda b, t: (0, 0))
    b_spec = pl.BlockSpec((1, D), lambda b, t: (0, 0))
    o_spec = pl.BlockSpec((1, q_tile, D), lambda b, t: (b, t, 0))
    full_spec = pl.BlockSpec((1, S, D), lambda b, t: (b, 0, 0))

    # batch axis "parallel" (megacore on v7x); q-tile axis "arbitrary" so the
    # cached K/V scratch from t==0 is valid for all later tiles of the same b.
    # TODO(synk): for B == 1 on v7x, add a head-group parallel axis so the
    #             second TensorCore is not idle.
    compiler_params = pltpu.CompilerParams(
        dimension_semantics=("parallel", "arbitrary"),
        vmem_limit_bytes=vmem_limit,
    )
    out_shape = jax.ShapeDtypeStruct((B, S, D), out_dtype)

    if self_attn:
        kernel = functools.partial(
            _mha_self_kernel, num_heads=num_heads, d_k=d_k, scale=scale,
            q_tile=q_tile, compute_dtype=compute_dtype, approx=approx)
        return pl.pallas_call(
            kernel,
            out_shape=out_shape,
            grid_spec=pltpu.PrefetchScalarGridSpec(
                num_scalar_prefetch=0,
                grid=(B, nq),
                in_specs=[full_spec, w_spec, b_spec, w_spec, b_spec],
                out_specs=o_spec,
                scratch_shapes=[pltpu.VMEM((S, D), compute_dtype)],
            ),
            compiler_params=compiler_params,
        )(query, wq, bq, wo, bo)

    kernel = functools.partial(
        _mha_kernel, num_heads=num_heads, d_k=d_k, scale=scale,
        compute_dtype=compute_dtype, approx=approx)
    q_spec = pl.BlockSpec((1, q_tile, D), lambda b, t: (b, t, 0))
    return pl.pallas_call(
        kernel,
        out_shape=out_shape,
        grid_spec=pltpu.PrefetchScalarGridSpec(
            num_scalar_prefetch=0,
            grid=(B, nq),
            in_specs=[q_spec, full_spec, full_spec, w_spec, b_spec, w_spec, b_spec],
            out_specs=o_spec,
            scratch_shapes=[pltpu.VMEM((S, D), compute_dtype),
                            pltpu.VMEM((S, D), compute_dtype)],
        ),
        compiler_params=compiler_params,
    )(query, key, value, wq, bq, wo, bo)


# --------------------------------------------------------------------------
# pure-JAX reference (matches the PyTorch module's semantics)
# --------------------------------------------------------------------------
def _reference_mha(query, key, value, params, *, num_heads):
    B, S, D = query.shape
    d_k = D // num_heads
    wq, bq = params["wq"], params["bq"]
    wo, bo = params["wo"], params["bo"]
    # linear_q is used for q, k and v (as in the PyTorch code)
    q = (query @ wq + bq).reshape(B, S, num_heads, d_k).transpose(0, 2, 1, 3)
    k = (key @ wq + bq).reshape(B, S, num_heads, d_k).transpose(0, 2, 1, 3)
    v = (value @ wq + bq).reshape(B, S, num_heads, d_k).transpose(0, 2, 1, 3)
    scores = jnp.einsum("bhqd,bhkd->bhqk", q, k) / math.sqrt(d_k)
    attn = jax.nn.softmax(scores, axis=-1)
    out = jnp.einsum("bhqk,bhkd->bhqd", attn, v)
    out = out.transpose(0, 2, 1, 3).reshape(B, S, D)
    return out @ wo + bo


if __name__ == "__main__":
    def make_params(key, d_model):
        kw_q, kb_q, kw_o, kb_o = jax.random.split(key, 4)
        bound = 1.0 / math.sqrt(d_model)
        return {
            "wq": jax.random.uniform(kw_q, (d_model, d_model), jnp.float32, -bound, bound),
            "bq": jax.random.uniform(kb_q, (d_model,), jnp.float32, -bound, bound),
            "wo": jax.random.uniform(kw_o, (d_model, d_model), jnp.float32, -bound, bound),
            "bo": jax.random.uniform(kb_o, (d_model,), jnp.float32, -bound, bound),
        }

    def run_case(B, S, d_model, num_heads, q_tile=None, self_attn=False):
        root = jax.random.PRNGKey(0)
        k_q, k_k, k_v, k_p = jax.random.split(root, 4)
        query = jax.random.normal(k_q, (B, S, d_model), dtype=jnp.float32)
        if self_attn:
            key_in, value = query, query            # identical objects -> fast path
        else:
            key_in = jax.random.normal(k_k, (B, S, d_model), dtype=jnp.float32)
            value = jax.random.normal(k_v, (B, S, d_model), dtype=jnp.float32)
        params = make_params(k_p, d_model)

        ref = _reference_mha(query, key_in, value, params, num_heads=num_heads)

        # exact path: f32 matmul operands, exact reciprocal
        out_f32 = jax.block_until_ready(multi_head_attention(
            query, key_in, value, params, num_heads=num_heads,
            q_tile=q_tile, compute_dtype=jnp.float32))
        assert out_f32.shape == (B, S, d_model)
        assert jnp.allclose(out_f32, ref, atol=2e-3, rtol=2e-3), "f32 path mismatch"

        # fast path: bf16 MXU operands, f32 accumulation, approx reciprocal
        out_bf16 = jax.block_until_ready(multi_head_attention(
            query, key_in, value, params, num_heads=num_heads,
            q_tile=q_tile, compute_dtype=jnp.bfloat16))
        assert jnp.allclose(out_bf16.astype(jnp.float32), ref,
                            atol=5e-2, rtol=5e-2), "bf16 path mismatch"

    # whole-sequence path (grid = (B, 1))
    run_case(B=2, S=8, d_model=32, num_heads=4)
    # query-tiled path: K/V projected once at t==0 and cached across 2 q-tiles
    run_case(B=2, S=16, d_model=32, num_heads=4, q_tile=8)
    # self-attention fast path: single input, single projection per batch row
    run_case(B=2, S=16, d_model=32, num_heads=4, q_tile=8, self_attn=True)

    print("KERNEL_OK")
</pallas_src>

<mosaic_0001>
module attributes {stable_mosaic.version = 11 : i64} {
  func.func @_mha_kernel(%arg0: i32, %arg1: i32, %arg2: memref<1x8x32xf32, #tpu.memory_space<vmem>>, %arg3: memref<1x8x32xf32, #tpu.memory_space<vmem>>, %arg4: memref<1x8x32xf32, #tpu.memory_space<vmem>>, %arg5: memref<32x32xf32, #tpu.memory_space<vmem>>, %arg6: memref<1x32xf32, #tpu.memory_space<vmem>>, %arg7: memref<32x32xf32, #tpu.memory_space<vmem>>, %arg8: memref<1x32xf32, #tpu.memory_space<vmem>>, %arg9: memref<1x8x32xf32, #tpu.memory_space<vmem>>, %arg10: memref<8x32xf32, #tpu.memory_space<vmem>>, %arg11: memref<8x32xf32, #tpu.memory_space<vmem>>) attributes {dimension_semantics = [#tpu.dimension_semantics<parallel>, #tpu.dimension_semantics<arbitrary>], iteration_bounds = array<i64: 2, 1>, scalar_prefetch = 0 : i64, scratch_operands = 2 : i64, tpu.core_type = #tpu.core_type<tc>, window_params = [{transform_indices = @transform_0, window_bounds = array<i64: 1, 8, 32>}, {transform_indices = @transform_1, window_bounds = array<i64: 1, 8, 32>}, {transform_indices = @transform_2, window_bounds = array<i64: 1, 8, 32>}, {pipeline_mode = #tpu.pipeline_mode<synchronous>, transform_indices = @transform_3, window_bounds = array<i64: 32, 32>}, {pipeline_mode = #tpu.pipeline_mode<synchronous>, transform_indices = @transform_4, window_bounds = array<i64: 1, 32>}, {pipeline_mode = #tpu.pipeline_mode<synchronous>, transform_indices = @transform_5, window_bounds = array<i64: 32, 32>}, {pipeline_mode = #tpu.pipeline_mode<synchronous>, transform_indices = @transform_6, window_bounds = array<i64: 1, 32>}, {transform_indices = @transform_7, window_bounds = array<i64: 1, 8, 32>}]} {
    %c0_i32 = arith.constant 0 : i32
    %0 = arith.cmpi eq, %arg1, %c0_i32 : i32
    %1 = arith.extui %0 : i1 to i32
    %c0_i32_0 = arith.constant 0 : i32
    %2 = arith.cmpi ne, %1, %c0_i32_0 : i32
    scf.if %2 {
      %c0_36 = arith.constant 0 : index
      %c0_37 = arith.constant 0 : index
      %83 = vector.load %arg5[%c0_36, %c0_37] : memref<32x32xf32, #tpu.memory_space<vmem>>, vector<32x32xf32>
      %c0_38 = arith.constant 0 : index
      %c0_39 = arith.constant 0 : index
      %84 = vector.load %arg6[%c0_38, %c0_39] : memref<1x32xf32, #tpu.memory_space<vmem>>, vector<1x32xf32>
      %c0_40 = arith.constant 0 : index
      %c0_41 = arith.constant 0 : index
      %c0_42 = arith.constant 0 : index
      %85 = vector.load %arg3[%c0_40, %c0_41, %c0_42] : memref<1x8x32xf32, #tpu.memory_space<vmem>>, vector<1x8x32xf32>
      %86 = vector.shape_cast %85 : vector<1x8x32xf32> to vector<8x32xf32>
      %cst_43 = arith.constant dense<0.000000e+00> : vector<8x32xf32>
      %87 = tpu.matmul %86, %83, %cst_43 {dimension_numbers = #tpu.dot_dimension_numbers<[1], [0], [0], [1], [0, 0, 1, 1], [], []>} : vector<8x32xf32>, vector<32x32xf32>, vector<8x32xf32> -> vector<8x32xf32>
      %88 = vector.broadcast %84 : vector<1x32xf32> to vector<8x32xf32>
      %89 = arith.addf %87, %88 : vector<8x32xf32>
      %c0_44 = arith.constant 0 : index
      %c0_45 = arith.constant 0 : index
      %90 = vector.load %arg10[%c0_44, %c0_45] : memref<8x32xf32, #tpu.memory_space<vmem>>, vector<8x32xf32>
      tpu.vector_store %arg10[%c0_44, %c0_45], %89 {strides = array<i32>} : memref<8x32xf32, #tpu.memory_space<vmem>>, vector<8x32xf32>,
      %c0_46 = arith.constant 0 : index
      %c0_47 = arith.constant 0 : index
      %c0_48 = arith.constant 0 : index
      %91 = vector.load %arg4[%c0_46, %c0_47, %c0_48] : memref<1x8x32xf32, #tpu.memory_space<vmem>>, vector<1x8x32xf32>
      %92 = vector.shape_cast %91 : vector<1x8x32xf32> to vector<8x32xf32>
      %cst_49 = arith.constant dense<0.000000e+00> : vector<8x32xf32>
      %93 = tpu.matmul %92, %83, %cst_49 {dimension_numbers = #tpu.dot_dimension_numbers<[1], [0], [0], [1], [0, 0, 1, 1], [], []>} : vector<8x32xf32>, vector<32x32xf32>, vector<8x32xf32> -> vector<8x32xf32>
      %94 = vector.broadcast %84 : vector<1x32xf32> to vector<8x32xf32>
      %95 = arith.addf %93, %94 : vector<8x32xf32>
      %c0_50 = arith.constant 0 : index
      %c0_51 = arith.constant 0 : index
      %96 = vector.load %arg11[%c0_50, %c0_51] : memref<8x32xf32, #tpu.memory_space<vmem>>, vector<8x32xf32>
      tpu.vector_store %arg11[%c0_50, %c0_51], %95 {strides = array<i32>} : memref<8x32xf32, #tpu.memory_space<vmem>>, vector<8x32xf32>,
    } else {
    }
    %c0 = arith.constant 0 : index
    %c0_1 = arith.constant 0 : index
    %c0_2 = arith.constant 0 : index
    %3 = vector.load %arg2[%c0, %c0_1, %c0_2] : memref<1x8x32xf32, #tpu.memory_space<vmem>>, vector<1x8x32xf32>
    %4 = vector.shape_cast %3 : vector<1x8x32xf32> to vector<8x32xf32>
    %c0_3 = arith.constant 0 : index
    %c0_4 = arith.constant 0 : index
    %5 = vector.load %arg5[%c0_3, %c0_4] : memref<32x32xf32, #tpu.memory_space<vmem>>, vector<32x32xf32>
    %cst = arith.constant dense<0.000000e+00> : vector<8x32xf32>
    %6 = tpu.matmul %4, %5, %cst {dimension_numbers = #tpu.dot_dimension_numbers<[1], [0], [0], [1], [0, 0, 1, 1], [], []>} : vector<8x32xf32>, vector<32x32xf32>, vector<8x32xf32> -> vector<8x32xf32>
    %c0_5 = arith.constant 0 : index
    %c0_6 = arith.constant 0 : index
    %7 = vector.load %arg6[%c0_5, %c0_6] : memref<1x32xf32, #tpu.memory_space<vmem>>, vector<1x32xf32>
    %8 = vector.broadcast %7 : vector<1x32xf32> to vector<8x32xf32>
    %9 = arith.addf %6, %8 : vector<8x32xf32>
    %cst_7 = arith.constant 0.353553385 : f32
    %10 = vector.broadcast %cst_7 : f32 to vector<8x32xf32>
    %11 = arith.mulf %9, %10 : vector<8x32xf32>
    %c0_8 = arith.constant 0 : index
    %c0_9 = arith.constant 0 : index
    %12 = vector.load %arg10[%c0_8, %c0_9] : memref<8x32xf32, #tpu.memory_space<vmem>>, vector<8x32xf32>
    %c0_10 = arith.constant 0 : index
    %c0_11 = arith.constant 0 : index
    %13 = vector.load %arg11[%c0_10, %c0_11] : memref<8x32xf32, #tpu.memory_space<vmem>>, vector<8x32xf32>
    %14 = vector.extract_strided_slice %11 {offsets = [0, 0], sizes = [8, 8], strides = [1, 1]} : vector<8x32xf32> to vector<8x8xf32>
    %15 = vector.extract_strided_slice %12 {offsets = [0, 0], sizes = [8, 8], strides = [1, 1]} : vector<8x32xf32> to vector<8x8xf32>
    %cst_12 = arith.constant dense<0.000000e+00> : vector<8x8xf32>
    %16 = tpu.matmul %14, %15, %cst_12 {dimension_numbers = #tpu.dot_dimension_numbers<[1], [1], [0], [0], [0, 0, 1, 0], [], []>} : vector<8x8xf32>, vector<8x8xf32>, vector<8x8xf32> -> vector<8x8xf32>
    %cst_13 = arith.constant dense<0xFF800000> : vector<8xf32>
    %17 = vector.multi_reduction <maximumf>, %16, %cst_13 [1] : vector<8x8xf32> to vector<8xf32>
    %18 = vector.shape_cast %17 : vector<8xf32> to vector<8x1xf32>
    %19 = vector.broadcast %18 : vector<8x1xf32> to vector<8x8xf32>
    %20 = arith.subf %16, %19 : vector<8x8xf32>
    %21 = math.exp %20 : vector<8x8xf32>
    %cst_14 = arith.constant dense<0.000000e+00> : vector<8xf32>
    %22 = vector.multi_reduction <add>, %21, %cst_14 [1] : vector<8x8xf32> to vector<8xf32>
    %23 = vector.shape_cast %22 : vector<8xf32> to vector<8x1xf32>
    %24 = vector.extract_strided_slice %13 {offsets = [0, 0], sizes = [8, 8], strides = [1, 1]} : vector<8x32xf32> to vector<8x8xf32>
    %cst_15 = arith.constant dense<0.000000e+00> : vector<8x8xf32>
    %25 = tpu.matmul %21, %24, %cst_15 {dimension_numbers = #tpu.dot_dimension_numbers<[1], [0], [0], [1], [0, 0, 1, 1], [], []>} : vector<8x8xf32>, vector<8x8xf32>, vector<8x8xf32> -> vector<8x8xf32>
    %26 = tpu.reciprocal %23 : vector<8x1xf32> -> vector<8x1xf32>
    %27 = vector.broadcast %26 : vector<8x1xf32> to vector<8x8xf32>
    %28 = arith.mulf %25, %27 : vector<8x8xf32>
    %29 = vector.extract_strided_slice %11 {offsets = [0, 8], sizes = [8, 8], strides = [1, 1]} : vector<8x32xf32> to vector<8x8xf32>
    %30 = vector.extract_strided_slice %12 {offsets = [0, 8], sizes = [8, 8], strides = [1, 1]} : vector<8x32xf32> to vector<8x8xf32>
    %cst_16 = arith.constant dense<0.000000e+00> : vector<8x8xf32>
    %31 = tpu.matmul %29, %30, %cst_16 {dimension_numbers = #tpu.dot_dimension_numbers<[1], [1], [0], [0], [0, 0, 1, 0], [], []>} : vector<8x8xf32>, vector<8x8xf32>, vector<8x8xf32> -> vector<8x8xf32>
    %cst_17 = arith.constant dense<0xFF800000> : vector<8xf32>
    %32 = vector.multi_reduction <maximumf>, %31, %cst_17 [1] : vector<8x8xf32> to vector<8xf32>
    %33 = vector.shape_cast %32 : vector<8xf32> to vector<8x1xf32>
    %34 = vector.broadcast %33 : vector<8x1xf32> to vector<8x8xf32>
    %35 = arith.subf %31, %34 : vector<8x8xf32>
    %36 = math.exp %35 : vector<8x8xf32>
    %cst_18 = arith.constant dense<0.000000e+00> : vector<8xf32>
    %37 = vector.multi_reduction <add>, %36, %cst_18 [1] : vector<8x8xf32> to vector<8xf32>
    %38 = vector.shape_cast %37 : vector<8xf32> to vector<8x1xf32>
    %39 = vector.extract_strided_slice %13 {offsets = [0, 8], sizes = [8, 8], strides = [1, 1]} : vector<8x32xf32> to vector<8x8xf32>
    %cst_19 = arith.constant dense<0.000000e+00> : vector<8x8xf32>
    %40 = tpu.matmul %36, %39, %cst_19 {dimension_numbers = #tpu.dot_dimension_numbers<[1], [0], [0], [1], [0, 0, 1, 1], [], []>} : vector<8x8xf32>, vector<8x8xf32>, vector<8x8xf32> -> vector<8x8xf32>
    %41 = tpu.reciprocal %38 : vector<8x1xf32> -> vector<8x1xf32>
    %42 = vector.broadcast %41 : vector<8x1xf32> to vector<8x8xf32>
    %43 = arith.mulf %40, %42 : vector<8x8xf32>
    %44 = vector.extract_strided_slice %11 {offsets = [0, 16], sizes = [8, 8], strides = [1, 1]} : vector<8x32xf32> to vector<8x8xf32>
    %45 = vector.extract_strided_slice %12 {offsets = [0, 16], sizes = [8, 8], strides = [1, 1]} : vector<8x32xf32> to vector<8x8xf32>
    %cst_20 = arith.constant dense<0.000000e+00> : vector<8x8xf32>
    %46 = tpu.matmul %44, %45, %cst_20 {dimension_numbers = #tpu.dot_dimension_numbers<[1], [1], [0], [0], [0, 0, 1, 0], [], []>} : vector<8x8xf32>, vector<8x8xf32>, vector<8x8xf32> -> vector<8x8xf32>
    %cst_21 = arith.constant dense<0xFF800000> : vector<8xf32>
    %47 = vector.multi_reduction <maximumf>, %46, %cst_21 [1] : vector<8x8xf32> to vector<8xf32>
    %48 = vector.shape_cast %47 : vector<8xf32> to vector<8x1xf32>
    %49 = vector.broadcast %48 : vector<8x1xf32> to vector<8x8xf32>
    %50 = arith.subf %46, %49 : vector<8x8xf32>
    %51 = math.exp %50 : vector<8x8xf32>
    %cst_22 = arith.constant dense<0.000000e+00> : vector<8xf32>
    %52 = vector.multi_reduction <add>, %51, %cst_22 [1] : vector<8x8xf32> to vector<8xf32>
    %53 = vector.shape_cast %52 : vector<8xf32> to vector<8x1xf32>
    %54 = vector.extract_strided_slice %13 {offsets = [0, 16], sizes = [8, 8], strides = [1, 1]} : vector<8x32xf32> to vector<8x8xf32>
    %cst_23 = arith.constant dense<0.000000e+00> : vector<8x8xf32>
    %55 = tpu.matmul %51, %54, %cst_23 {dimension_numbers = #tpu.dot_dimension_numbers<[1], [0], [0], [1], [0, 0, 1, 1], [], []>} : vector<8x8xf32>, vector<8x8xf32>, vector<8x8xf32> -> vector<8x8xf32>
    %56 = tpu.reciprocal %53 : vector<8x1xf32> -> vector<8x1xf32>
    %57 = vector.broadcast %56 : vector<8x1xf32> to vector<8x8xf32>
    %58 = arith.mulf %55, %57 : vector<8x8xf32>
    %59 = vector.extract_strided_slice %11 {offsets = [0, 24], sizes = [8, 8], strides = [1, 1]} : vector<8x32xf32> to vector<8x8xf32>
    %60 = vector.extract_strided_slice %12 {offsets = [0, 24], sizes = [8, 8], strides = [1, 1]} : vector<8x32xf32> to vector<8x8xf32>
    %cst_24 = arith.constant dense<0.000000e+00> : vector<8x8xf32>
    %61 = tpu.matmul %59, %60, %cst_24 {dimension_numbers = #tpu.dot_dimension_numbers<[1], [1], [0], [0], [0, 0, 1, 0], [], []>} : vector<8x8xf32>, vector<8x8xf32>, vector<8x8xf32> -> vector<8x8xf32>
    %cst_25 = arith.constant dense<0xFF800000> : vector<8xf32>
    %62 = vector.multi_reduction <maximumf>, %61, %cst_25 [1] : vector<8x8xf32> to vector<8xf32>
    %63 = vector.shape_cast %62 : vector<8xf32> to vector<8x1xf32>
    %64 = vector.broadcast %63 : vector<8x1xf32> to vector<8x8xf32>
    %65 = arith.subf %61, %64 : vector<8x8xf32>
    %66 = math.exp %65 : vector<8x8xf32>
    %cst_26 = arith.constant dense<0.000000e+00> : vector<8xf32>
    %67 = vector.multi_reduction <add>, %66, %cst_26 [1] : vector<8x8xf32> to vector<8xf32>
    %68 = vector.shape_cast %67 : vector<8xf32> to vector<8x1xf32>
    %69 = vector.extract_strided_slice %13 {offsets = [0, 24], sizes = [8, 8], strides = [1, 1]} : vector<8x32xf32> to vector<8x8xf32>
    %cst_27 = arith.constant dense<0.000000e+00> : vector<8x8xf32>
    %70 = tpu.matmul %66, %69, %cst_27 {dimension_numbers = #tpu.dot_dimension_numbers<[1], [0], [0], [1], [0, 0, 1, 1], [], []>} : vector<8x8xf32>, vector<8x8xf32>, vector<8x8xf32> -> vector<8x8xf32>
    %71 = tpu.reciprocal %68 : vector<8x1xf32> -> vector<8x1xf32>
    %72 = vector.broadcast %71 : vector<8x1xf32> to vector<8x8xf32>
    %73 = arith.mulf %70, %72 : vector<8x8xf32>
    %74 = tpu.concatenate %28, %43, %58, %73 in 1 : vector<8x8xf32>, vector<8x8xf32>, vector<8x8xf32>, vector<8x8xf32> -> vector<8x32xf32>
    %c0_28 = arith.constant 0 : index
    %c0_29 = arith.constant 0 : index
    %75 = vector.load %arg7[%c0_28, %c0_29] : memref<32x32xf32, #tpu.memory_space<vmem>>, vector<32x32xf32>
    %cst_30 = arith.constant dense<0.000000e+00> : vector<8x32xf32>
    %76 = tpu.matmul %74, %75, %cst_30 {dimension_numbers = #tpu.dot_dimension_numbers<[1], [0], [0], [1], [0, 0, 1, 1], [], []>} : vector<8x32xf32>, vector<32x32xf32>, vector<8x32xf32> -> vector<8x32xf32>
    %c0_31 = arith.constant 0 : index
    %c0_32 = arith.constant 0 : index
    %77 = vector.load %arg8[%c0_31, %c0_32] : memref<1x32xf32, #tpu.memory_space<vmem>>, vector<1x32xf32>
    %78 = vector.broadcast %77 : vector<1x32xf32> to vector<8x32xf32>
    %79 = arith.addf %76, %78 : vector<8x32xf32>
    %c0_33 = arith.constant 0 : index
    %c0_34 = arith.constant 0 : index
    %c0_35 = arith.constant 0 : index
    %80 = vector.load %arg9[%c0_33, %c0_34, %c0_35] : memref<1x8x32xf32, #tpu.memory_space<vmem>>, vector<1x8x32xf32>
    %81 = vector.shape_cast %80 : vector<1x8x32xf32> to vector<8x32xf32>
    %82 = vector.shape_cast %79 : vector<8x32xf32> to vector<1x8x32xf32>
    tpu.vector_store %arg9[%c0_33, %c0_34, %c0_35], %82 {strides = array<i32>} : memref<1x8x32xf32, #tpu.memory_space<vmem>>, vector<1x8x32xf32>,
    return
  }
  func.func @transform_0(%arg0: i32, %arg1: i32) -> (i32, i32, i32) {
    %c0_i32 = arith.constant 0 : i32
    %c0_i32_0 = arith.constant 0 : i32
    return %arg0, %arg1, %c0_i32 : i32, i32, i32
  }
  func.func @transform_1(%arg0: i32, %arg1: i32) -> (i32, i32, i32) {
    %c0_i32 = arith.constant 0 : i32
    %c0_i32_0 = arith.constant 0 : i32
    %c0_i32_1 = arith.constant 0 : i32
    return %arg0, %c0_i32, %c0_i32_0 : i32, i32, i32
  }
  func.func @transform_2(%arg0: i32, %arg1: i32) -> (i32, i32, i32) {
    %c0_i32 = arith.constant 0 : i32
    %c0_i32_0 = arith.constant 0 : i32
    %c0_i32_1 = arith.constant 0 : i32
    return %arg0, %c0_i32, %c0_i32_0 : i32, i32, i32
  }
  func.func @transform_3(%arg0: i32, %arg1: i32) -> (i32, i32) {
    %c0_i32 = arith.constant 0 : i32
    %c0_i32_0 = arith.constant 0 : i32
    %c0_i32_1 = arith.constant 0 : i32
    return %c0_i32, %c0_i32_0 : i32, i32
  }
  func.func @transform_4(%arg0: i32, %arg1: i32) -> (i32, i32) {
    %c0_i32 = arith.constant 0 : i32
    %c0_i32_0 = arith.constant 0 : i32
    %c0_i32_1 = arith.constant 0 : i32
    return %c0_i32, %c0_i32_0 : i32, i32
  }
  func.func @transform_5(%arg0: i32, %arg1: i32) -> (i32, i32) {
    %c0_i32 = arith.constant 0 : i32
    %c0_i32_0 = arith.constant 0 : i32
    %c0_i32_1 = arith.constant 0 : i32
    return %c0_i32, %c0_i32_0 : i32, i32
  }
  func.func @transform_6(%arg0: i32, %arg1: i32) -> (i32, i32) {
    %c0_i32 = arith.constant 0 : i32
    %c0_i32_0 = arith.constant 0 : i32
    %c0_i32_1 = arith.constant 0 : i32
    return %c0_i32, %c0_i32_0 : i32, i32
  }
  func.func @transform_7(%arg0: i32, %arg1: i32) -> (i32, i32, i32) {
    %c0_i32 = arith.constant 0 : i32
    %c0_i32_0 = arith.constant 0 : i32
    return %arg0, %arg1, %c0_i32 : i32, i32, i32
  }
}

</mosaic_0001>

<llo_original>
// kernel: tpu_custom_call.1
$region0: #{tpu_custom_call.1}
  #allocation0 [shape = 'u32[]', space=smem, size = 0x4, offset = 0x4, fixed_abs, tag = 'smem constant byte address 0x4 - core index']
  #allocation1 [shape = 'u32[144,128]{1,0:T(1,128)}', space=vmem, size = 0x12000, scoped, tag = 'internal scratch']
  #allocation2 [shape = 'f32[8,32]{1,0:T(8,128)}', space=vmem, size = 0x1000, scoped, tag = 'scratch operand']
  #allocation3 [shape = 'f32[8,32]{1,0:T(8,128)}', space=vmem, size = 0x1000, scoped, tag = 'scratch operand']
  %s0 = inlined_call_operand.hbm [shape: f32[2,8,32], index: 0, kind: input, shape index: {}]
  %s1 = inlined_call_operand.hbm [shape: f32[2,8,32], index: 1, kind: input, shape index: {}]
  %s2 = inlined_call_operand.hbm [shape: f32[2,8,32], index: 2, kind: input, shape index: {}]
  %s3 = inlined_call_operand.hbm [shape: f32[32,32], index: 3, kind: input, shape index: {}]
  %s4 = inlined_call_operand.vmem [shape: f32[1,32], index: 4, kind: input, shape index: {}]
  %s5 = inlined_call_operand.hbm [shape: f32[32,32], index: 5, kind: input, shape index: {}]
  %s6 = inlined_call_operand.vmem [shape: f32[1,32], index: 6, kind: input, shape index: {}]
  %s7 = inlined_call_operand.hbm [shape: f32[2,8,32], index: 7, kind: output, shape index: {}]
  %s8 = sld [smem:[#allocation0]]
  $region85: #{tpu_custom_call.1} parent=0
    _
  %s10 = ssub.s32 1, %s8
  %s11 = scalar_select 0, %s10, %s8
  $region1: #{tpu_custom_call.1} parent=0
    #allocation4 [shape = 'u8[8192]{0}', space=vmem, size = 0x2000, scoped, tag = 'input window, operand 0']
    #allocation5 [shape = 's32[2]{0}', space=sflag, size = 0x8, scoped, tag = 'scoped memory for tpu_custom_call.1']
    #allocation6 [shape = 's32[2]{0}', space=sflag, size = 0x8, scoped, tag = 'scoped memory for tpu_custom_call.1']
    #allocation7 [shape = 'u8[8192]{0}', space=vmem, size = 0x2000, scoped, tag = 'input window, operand 1']
    #allocation8 [shape = 's32[2]{0}', space=sflag, size = 0x8, scoped, tag = 'scoped memory for tpu_custom_call.1']
    #allocation9 [shape = 'u8[8192]{0}', space=vmem, size = 0x2000, scoped, tag = 'input window, operand 2']
    #allocation10 [shape = 'u8[16384]{0}', space=vmem, size = 0x4000, scoped, tag = 'input window, operand 3, single buffered']
    #allocation11 [shape = 's32[1]{0}', space=sflag, size = 0x4, scoped, tag = 'scoped memory for tpu_custom_call.1']
    #allocation12 [shape = 'u8[16384]{0}', space=vmem, size = 0x4000, scoped, tag = 'input window, operand 5, single buffered']
    #allocation13 [shape = 'u8[8192]{0}', space=vmem, size = 0x2000, scoped, tag = 'output window, operand 0']
    %12 = vsyncpa [#allocation5], 0
    %s13 = scalar_lea.sflag [#allocation5], 1
    %14 = vsyncpa %s13, 0
    %15 = vsyncpa [#allocation8], 0
    %s16 = scalar_lea.sflag [#allocation8], 1
    %17 = vsyncpa %s16, 0
    %18 = vsyncpa [#allocation11], 0
    %19 = vsyncpa [#allocation6], 0
    %s20 = scalar_lea.sflag [#allocation6], 1
    %21 = vsyncpa %s20, 0
    loop: start=0, step=1, limit=4
    $region2: #{tpu_custom_call.1} parent=1 // loop_pre_header
      _
    $region3: #{tpu_custom_call.1} parent=1 // loop_header
      %s23 = sphi 0, %s27
      %p24 = scmp.ge.s32.totalorder %s23, 4
      %s30 = sphi 0, %s42
      %s31 = sphi 0, %s38
      %s32 = sphi 0, %s30
      %s33 = sphi 0, %s31
      %s34 = sphi 0, %s32
      %s35 = sphi 0, %s33
      %s47 = sphi 0, %s49
      %s50 = sphi 0, %s47
      %s51 = sphi 0, %s50
      %s67 = sphi 0, %s51
      %s73 = sphi 0, %s75
      %s76 = sphi 0, %s73
      %s77 = sphi 0, %s76
      %s93 = sphi 0, %s77
      %s99 = sphi 0, %s101
      %s102 = sphi 0, %s99
      %s103 = sphi 0, %s102
      %s119 = sphi 0, %s103
      %s123 = sphi 0, %s123
      %s125 = sphi 0, %s123
      %s126 = sphi 0, %s125
      %s140 = sphi 0, %s126
      %s144 = sphi 0, %s144
      %s146 = sphi 0, %s144
      %s147 = sphi 0, %s146
      %s161 = sphi 0, %s147
      %s165 = sphi 0, %s165
      %s167 = sphi 0, %s165
      %s168 = sphi 0, %s167
      %s182 = sphi 0, %s168
      %s186 = sphi 0, %s186
      %s188 = sphi 0, %s186
      %s189 = sphi 0, %s188
      %s203 = sphi 0, %s189
      %s211 = sphi 0, %s213
      %s214 = sphi 0, %s211
      %s215 = sphi 0, %s214
      %s231 = sphi 0, %s215
    $region4: #{tpu_custom_call.1} parent=1 // loop_header_branch
      %26 = sbr.rel (%p24) target = $region8
    $region5: #{tpu_custom_call.1} parent=1 // loop_body
      %s28 = ssub.s32 %s23, 1
      %s29 = ssub.s32 %s23, 2
      %s36 = sadd.s32 1, %s31
      %p37 = scmp.ge.s32.totalorder %s36, 1
      %s38 = scalar_select %p37, 0, %s36
      %s39 = sadd.s32 1, %s30
      %s40 = scalar_select %p37, %s39, %s30
      %p41 = scmp.ge.s32.totalorder %s40, 2
      %s42 = scalar_select %p41, 0, %s40
      %s43 = ssub.s32 %s30, %s42
      %s44 = ssub.s32 %s31, %s38
      %s45 = sor.u32 %s43, %s44
      %p46 = scmp.eq.s32.totalorder %s45, 0
      %s48 = sadd.s32 %s47, 1
      %s49 = scalar_select %p46, %s47, %s48
      %p52 = pneg %p46
      %p53 = scmp.eq.s32.totalorder %s23, 1
      %p54 = por %p52, %p53
      %p55 = scmp.ne.s32.totalorder %s47, %s50
      %p56 = scmp.eq.s32.totalorder %s23, 0
      %p57 = por %p55, %p56
      %p58 = scmp.ne.s32.totalorder %s47, %s50
      %p59 = scmp.eq.s32.totalorder %s28, 1
      %p60 = por %p58, %p59
      %p61 = scmp.ne.s32.totalorder %s50, %s51
      %p62 = scmp.eq.s32.totalorder %s28, 0
      %p63 = por %p61, %p62
      %p64 = scmp.ne.s32.totalorder %s50, %s51
      %p65 = scmp.eq.s32.totalorder %s29, 1
      %p66 = por %p64, %p65
      %p68 = scmp.ne.s32.totalorder %s51, %s67
      %p69 = scmp.eq.s32.totalorder %s29, 0
      %p70 = por %p68, %p69
      %s71 = ssub.s32 %s30, %s42
      %p72 = scmp.eq.s32.totalorder %s71, 0
      %s74 = sadd.s32 %s73, 1
      %s75 = scalar_select %p72, %s73, %s74
      %p78 = pneg %p72
      %p79 = scmp.eq.s32.totalorder %s23, 1
      %p80 = por %p78, %p79
      %p81 = scmp.ne.s32.totalorder %s73, %s76
      %p82 = scmp.eq.s32.totalorder %s23, 0
      %p83 = por %p81, %p82
      %p84 = scmp.ne.s32.totalorder %s73, %s76
      %p85 = scmp.eq.s32.totalorder %s28, 1
      %p86 = por %p84, %p85
      %p87 = scmp.ne.s32.totalorder %s76, %s77
      %p88 = scmp.eq.s32.totalorder %s28, 0
      %p89 = por %p87, %p88
      %p90 = scmp.ne.s32.totalorder %s76, %s77
      %p91 = scmp.eq.s32.totalorder %s29, 1
      %p92 = por %p90, %p91
      %p94 = scmp.ne.s32.totalorder %s77, %s93
      %p95 = scmp.eq.s32.totalorder %s29, 0
      %p96 = por %p94, %p95
      %s97 = ssub.s32 %s30, %s42
      %p98 = scmp.eq.s32.totalorder %s97, 0
      %s100 = sadd.s32 %s99, 1
      %s101 = scalar_select %p98, %s99, %s100
      %p104 = pneg %p98
      %p105 = scmp.eq.s32.totalorder %s23, 1
      %p106 = por %p104, %p105
      %p107 = scmp.ne.s32.totalorder %s99, %s102
      %p108 = scmp.eq.s32.totalorder %s23, 0
      %p109 = por %p107, %p108
      %p110 = scmp.ne.s32.totalorder %s99, %s102
      %p111 = scmp.eq.s32.totalorder %s28, 1
      %p112 = por %p110, %p111
      %p113 = scmp.ne.s32.totalorder %s102, %s103
      %p114 = scmp.eq.s32.totalorder %s28, 0
      %p115 = por %p113, %p114
      %p116 = scmp.ne.s32.totalorder %s102, %s103
      %p117 = scmp.eq.s32.totalorder %s29, 1
      %p118 = por %p116, %p117
      %p120 = scmp.ne.s32.totalorder %s103, %s119
      %p121 = scmp.eq.s32.totalorder %s29, 0
      %p122 = por %p120, %p121
      %s124 = sadd.s32 %s123, 1
      %p127 = scmp.eq.s32.totalorder %s23, 1
      %p128 = scmp.ne.s32.totalorder %s123, %s125
      %p129 = scmp.eq.s32.totalorder %s23, 0
      %p130 = por %p128, %p129
      %p131 = scmp.ne.s32.totalorder %s123, %s125
      %p132 = scmp.eq.s32.totalorder %s28, 1
      %p133 = por %p131, %p132
      %p134 = scmp.ne.s32.totalorder %s125, %s126
      %p135 = scmp.eq.s32.totalorder %s28, 0
      %p136 = por %p134, %p135
      %p137 = scmp.ne.s32.totalorder %s125, %s126
      %p138 = scmp.eq.s32.totalorder %s29, 1
      %p139 = por %p137, %p138
      %p141 = scmp.ne.s32.totalorder %s126, %s140
      %p142 = scmp.eq.s32.totalorder %s29, 0
      %p143 = por %p141, %p142
      %s145 = sadd.s32 %s144, 1
      %p148 = scmp.eq.s32.totalorder %s23, 1
      %p149 = scmp.ne.s32.totalorder %s144, %s146
      %p150 = scmp.eq.s32.totalorder %s23, 0
      %p151 = por %p149, %p150
      %p152 = scmp.ne.s32.totalorder %s144, %s146
      %p153 = scmp.eq.s32.totalorder %s28, 1
      %p154 = por %p152, %p153
      %p155 = scmp.ne.s32.totalorder %s146, %s147
      %p156 = scmp.eq.s32.totalorder %s28, 0
      %p157 = por %p155, %p156
      %p158 = scmp.ne.s32.totalorder %s146, %s147
      %p159 = scmp.eq.s32.totalorder %s29, 1
      %p160 = por %p158, %p159
      %p162 = scmp.ne.s32.totalorder %s147, %s161
      %p163 = scmp.eq.s32.totalorder %s29, 0
      %p164 = por %p162, %p163
      %s166 = sadd.s32 %s165, 1
      %p169 = scmp.eq.s32.totalorder %s23, 1
      %p170 = scmp.ne.s32.totalorder %s165, %s167
      %p171 = scmp.eq.s32.totalorder %s23, 0
      %p172 = por %p170, %p171
      %p173 = scmp.ne.s32.totalorder %s165, %s167
      %p174 = scmp.eq.s32.totalorder %s28, 1
      %p175 = por %p173, %p174
      %p176 = scmp.ne.s32.totalorder %s167, %s168
      %p177 = scmp.eq.s32.totalorder %s28, 0
      %p178 = por %p176, %p177
      %p179 = scmp.ne.s32.totalorder %s167, %s168
      %p180 = scmp.eq.s32.totalorder %s29, 1
      %p181 = por %p179, %p180
      %p183 = scmp.ne.s32.totalorder %s168, %s182
      %p184 = scmp.eq.s32.totalorder %s29, 0
      %p185 = por %p183, %p184
      %s187 = sadd.s32 %s186, 1
      %p190 = scmp.eq.s32.totalorder %s23, 1
      %p191 = scmp.ne.s32.totalorder %s186, %s188
      %p192 = scmp.eq.s32.totalorder %s23, 0
      %p193 = por %p191, %p192
      %p194 = scmp.ne.s32.totalorder %s186, %s188
      %p195 = scmp.eq.s32.totalorder %s28, 1
      %p196 = por %p194, %p195
      %p197 = scmp.ne.s32.totalorder %s188, %s189
      %p198 = scmp.eq.s32.totalorder %s28, 0
      %p199 = por %p197, %p198
      %p200 = scmp.ne.s32.totalorder %s188, %s189
      %p201 = scmp.eq.s32.totalorder %s29, 1
      %p202 = por %p200, %p201
      %p204 = scmp.ne.s32.totalorder %s189, %s203
      %p205 = scmp.eq.s32.totalorder %s29, 0
      %p206 = por %p204, %p205
      %s207 = ssub.s32 %s30, %s42
      %s208 = ssub.s32 %s31, %s38
      %s209 = sor.u32 %s207, %s208
      %p210 = scmp.eq.s32.totalorder %s209, 0
      %s212 = sadd.s32 %s211, 1
      %s213 = scalar_select %p210, %s211, %s212
      %p216 = pneg %p210
      %p217 = scmp.eq.s32.totalorder %s23, 1
      %p218 = por %p216, %p217
      %p219 = scmp.ne.s32.totalorder %s211, %s214
      %p220 = scmp.eq.s32.totalorder %s23, 0
      %p221 = por %p219, %p220
      %p222 = scmp.ne.s32.totalorder %s211, %s214
      %p223 = scmp.eq.s32.totalorder %s28, 1
      %p224 = por %p222, %p223
      %p225 = scmp.ne.s32.totalorder %s214, %s215
      %p226 = scmp.eq.s32.totalorder %s28, 0
      %p227 = por %p225, %p226
      %p228 = scmp.ne.s32.totalorder %s214, %s215
      %p229 = scmp.eq.s32.totalorder %s29, 1
      %p230 = por %p228, %p229
      %p232 = scmp.ne.s32.totalorder %s215, %s231
      %p233 = scmp.eq.s32.totalorder %s29, 0
      %p234 = por %p232, %p233
      %p235 = scmp.le.s32.totalorder 1, %s23
      %p236 = scmp.lt.s32.totalorder %s23, 3
      %p237 = pnand %p235, %p236
      %p238 = pneg %p237
      // Predicated region
      $region9: #{tpu_custom_call.1} parent=5 // pred_check
        _
      $region10: #{tpu_custom_call.1} parent=5 // pred_check_branch
        %240 = sbr.rel (%p237) target = $region12
      $region11: #{tpu_custom_call.1} parent=5 // pred_region
        %s241 = ssub.s32 %s23, 1
        // Predicated region
        $region13: #{tpu_custom_call.1} parent=11 // pred_check
          %p242 = pneg %p136
        $region14: #{tpu_custom_call.1} parent=11 // pred_check_branch
          %244 = sbr.rel (%p242) target = $region16
        $region15: #{tpu_custom_call.1} parent=11 // pred_region
          %s246 = ssub.s32 512, 512
          %247 = vsyncadd [#allocation11], %s246
          %s248 = sshll.u32 [#allocation10], 4
          %s249 = int_to_ptr.vmem [resolvable:$true] %s248
          %254 = dma.hbm_to_vmem [thread:$0]  %s3, 512, %s249, [#allocation11], 128, 128, 8
        $region16: #{tpu_custom_call.1} parent=11 // pred_fallthru
          _
        // Predicated region
        $region17: #{tpu_custom_call.1} parent=11 // pred_check
          %p255 = pneg %p157
        $region18: #{tpu_custom_call.1} parent=11 // pred_check_branch
          %257 = sbr.rel (%p255) target = $region20
        $region19: #{tpu_custom_call.1} parent=11 // pred_region
          _
        $region20: #{tpu_custom_call.1} parent=11 // pred_fallthru
          _
        // Predicated region
        $region21: #{tpu_custom_call.1} parent=11 // pred_check
          %p258 = pneg %p178
        $region22: #{tpu_custom_call.1} parent=11 // pred_check_branch
          %260 = sbr.rel (%p258) target = $region24
        $region23: #{tpu_custom_call.1} parent=11 // pred_region
          %s262 = ssub.s32 512, 512
          %263 = vsyncadd [#allocation11], %s262
          %s264 = sshll.u32 [#allocation12], 4
          %s265 = int_to_ptr.vmem [resolvable:$true] %s264
          %270 = dma.hbm_to_vmem [thread:$0]  %s5, 512, %s265, [#allocation11], 128, 128, 8
        $region24: #{tpu_custom_call.1} parent=11 // pred_fallthru
          _
        // Predicated region
        $region25: #{tpu_custom_call.1} parent=11 // pred_check
          %p271 = pneg %p199
        $region26: #{tpu_custom_call.1} parent=11 // pred_check_branch
          %273 = sbr.rel (%p271) target = $region28
        $region27: #{tpu_custom_call.1} parent=11 // pred_region
          _
        $region28: #{tpu_custom_call.1} parent=11 // pred_fallthru
          _
      $region12: #{tpu_custom_call.1} parent=5 // pred_fallthru
        _
      %p274 = scmp.lt.s32.totalorder %s23, 2
      // Predicated region
      $region29: #{tpu_custom_call.1} parent=5 // pred_check
        %p275 = pneg %p274
      $region30: #{tpu_custom_call.1} parent=5 // pred_check_branch
        %277 = sbr.rel (%p275) target = $region32
      $region31: #{tpu_custom_call.1} parent=5 // pred_region
        // Predicated region
        $region33: #{tpu_custom_call.1} parent=31 // pred_check
          %p278 = pneg %p57
        $region34: #{tpu_custom_call.1} parent=31 // pred_check_branch
          %280 = sbr.rel (%p278) target = $region36
        $region35: #{tpu_custom_call.1} parent=31 // pred_region
          %s281 = sand.u32 %s47, 1
          %s282 = scalar_lea.sflag [#allocation5], %s281
          %s283 = sand.u32 %s47, 1
          %s284 = smul.addr %s283, 8
          %s285 = scalar_lea.vmem [#allocation4], %s284
          %s287 = ssub.s32 128, 128
          %288 = vsyncadd %s282, %s287
          %s289 = sadd.s32 %s31, %s30
          %s290 = smul.addr %s289, 128
          %s291 = scalar_lea.hbm %s0, %s290
          %s293 = sshll.u32 %s285, 4
          %s294 = int_to_ptr.vmem [resolvable:$true] %s293
          %296 = dma.hbm_to_vmem [thread:$0]  %s291, 128, %s294, %s282
        $region36: #{tpu_custom_call.1} parent=31 // pred_fallthru
          _
        // Predicated region
        $region37: #{tpu_custom_call.1} parent=31 // pred_check
          %p297 = pneg %p83
        $region38: #{tpu_custom_call.1} parent=31 // pred_check_branch
          %299 = sbr.rel (%p297) target = $region40
        $region39: #{tpu_custom_call.1} parent=31 // pred_region
          %s300 = sand.u32 %s23, 1
          %s301 = scalar_lea.sflag [#allocation8], %s300
          %s302 = sand.u32 %s73, 1
          %s303 = smul.addr %s302, 8
          %s304 = scalar_lea.vmem [#allocation7], %s303
          %s306 = ssub.s32 128, 128
          %307 = vsyncadd %s301, %s306
          %s308 = smul.addr %s30, 128
          %s309 = scalar_lea.hbm %s1, %s308
          %s311 = sshll.u32 %s304, 4
          %s312 = int_to_ptr.vmem [resolvable:$true] %s311
          %314 = dma.hbm_to_vmem [thread:$0]  %s309, 128, %s312, %s301
        $region40: #{tpu_custom_call.1} parent=31 // pred_fallthru
          _
        // Predicated region
        $region41: #{tpu_custom_call.1} parent=31 // pred_check
          %p315 = pneg %p109
        $region42: #{tpu_custom_call.1} parent=31 // pred_check_branch
          %317 = sbr.rel (%p315) target = $region44
        $region43: #{tpu_custom_call.1} parent=31 // pred_region
          %s318 = sand.u32 %s23, 1
          %s319 = scalar_lea.sflag [#allocation8], %s318
          %s320 = sand.u32 %s99, 1
          %s321 = smul.addr %s320, 8
          %s322 = scalar_lea.vmem [#allocation9], %s321
          %s324 = ssub.s32 128, 128
          %325 = vsyncadd %s319, %s324
          %s326 = smul.addr %s30, 128
          %s327 = scalar_lea.hbm %s2, %s326
          %s329 = sshll.u32 %s322, 4
          %s330 = int_to_ptr.vmem [resolvable:$true] %s329
          %332 = dma.hbm_to_vmem [thread:$0]  %s327, 128, %s330, %s319
        $region44: #{tpu_custom_call.1} parent=31 // pred_fallthru
          _
      $region32: #{tpu_custom_call.1} parent=5 // pred_fallthru
        _
      %p333 = scmp.le.s32.totalorder 1, %s23
      %p334 = scmp.lt.s32.totalorder %s23, 3
      %p335 = pnand %p333, %p334
      %p336 = pneg %p335
      // Predicated region
      $region45: #{tpu_custom_call.1} parent=5 // pred_check
        _
      $region46: #{tpu_custom_call.1} parent=5 // pred_check_branch
        %338 = sbr.rel (%p335) target = $region48
      $region47: #{tpu_custom_call.1} parent=5 // pred_region
        %s339 = ssub.s32 %s23, 1
        %s340 = sand.u32 %s50, 1
        %s341 = scalar_lea.sflag [#allocation5], %s340
        %s342 = sand.u32 %s50, 1
        %s343 = smul.addr %s342, 8
        %s344 = scalar_lea.vmem [#allocation4], %s343
        // Predicated region
        $region49: #{tpu_custom_call.1} parent=47 // pred_check
          %p345 = pneg %p63
        $region50: #{tpu_custom_call.1} parent=47 // pred_check_branch
          %347 = sbr.rel (%p345) target = $region52
        $region51: #{tpu_custom_call.1} parent=47 // pred_region
          %348 = dma.done %s341, 128
        $region52: #{tpu_custom_call.1} parent=47 // pred_fallthru
          _
        %s349 = sand.u32 %s28, 1
        %s350 = scalar_lea.sflag [#allocation8], %s349
        %s351 = sand.u32 %s76, 1
        %s352 = smul.addr %s351, 8
        %s353 = scalar_lea.vmem [#allocation7], %s352
        // Predicated region
        $region53: #{tpu_custom_call.1} parent=47 // pred_check
          %p354 = pneg %p89
        $region54: #{tpu_custom_call.1} parent=47 // pred_check_branch
          %356 = sbr.rel (%p354) target = $region56
        $region55: #{tpu_custom_call.1} parent=47 // pred_region
          %357 = dma.done %s350, 128
        $region56: #{tpu_custom_call.1} parent=47 // pred_fallthru
          _
        %s358 = sand.u32 %s28, 1
        %s359 = scalar_lea.sflag [#allocation8], %s358
        %s360 = sand.u32 %s102, 1
        %s361 = smul.addr %s360, 8
        %s362 = scalar_lea.vmem [#allocation9], %s361
        // Predicated region
        $region57: #{tpu_custom_call.1} parent=47 // pred_check
          %p363 = pneg %p115
        $region58: #{tpu_custom_call.1} parent=47 // pred_check_branch
          %365 = sbr.rel (%p363) target = $region60
        $region59: #{tpu_custom_call.1} parent=47 // pred_region
          %366 = dma.done %s359, 128
        $region60: #{tpu_custom_call.1} parent=47 // pred_fallthru
          _
        // Predicated region
        $region61: #{tpu_custom_call.1} parent=47 // pred_check
          %p367 = pneg %p136
        $region62: #{tpu_custom_call.1} parent=47 // pred_check_branch
          %369 = sbr.rel (%p367) target = $region64
        $region63: #{tpu_custom_call.1} parent=47 // pred_region
          %370 = dma.done [#allocation11], 512
        $region64: #{tpu_custom_call.1} parent=47 // pred_fallthru
          _
        // Predicated region
        $region65: #{tpu_custom_call.1} parent=47 // pred_check
          %p371 = pneg %p178
        $region66: #{tpu_custom_call.1} parent=47 // pred_check_branch
          %373 = sbr.rel (%p371) target = $region68
        $region67: #{tpu_custom_call.1} parent=47 // pred_region
          %374 = dma.done [#allocation11], 512
        $region68: #{tpu_custom_call.1} parent=47 // pred_fallthru
          _
        %s375 = sand.u32 %s50, 1
        %s376 = scalar_lea.sflag [#allocation5], %s375
        %s377 = sand.u32 %s50, 1
        %s378 = smul.addr %s377, 8
        %s379 = scalar_lea.vmem [#allocation4], %s378
        %p380 = pneg %p63
        %p381 = pneg %p60
        %s382 = sand.u32 %s28, 1
        %s383 = scalar_lea.sflag [#allocation8], %s382
        %s384 = sand.u32 %s76, 1
        %s385 = smul.addr %s384, 8
        %s386 = scalar_lea.vmem [#allocation7], %s385
        %p387 = pneg %p89
        %p388 = pneg %p86
        %s389 = sand.u32 %s28, 1
        %s390 = scalar_lea.sflag [#allocation8], %s389
        %s391 = sand.u32 %s102, 1
        %s392 = smul.addr %s391, 8
        %s393 = scalar_lea.vmem [#allocation9], %s392
        %p394 = pneg %p115
        %p395 = pneg %p112
        %p396 = pneg %p136
        %p397 = pneg %p133
        %p398 = pneg %p157
        %p399 = pneg %p154
        %p400 = pneg %p178
        %p401 = pneg %p175
        %p402 = pneg %p199
        %p403 = pneg %p196
        %p404 = pneg %p227
        %p405 = pneg %p224
        %s406 = sand.u32 %s214, 1
        %s407 = scalar_lea.sflag [#allocation6], %s406
        %s408 = sand.u32 %s214, 1
        %s409 = smul.addr %s408, 8
        %s410 = scalar_lea.vmem [#allocation13], %s409
        %p411 = scmp.eq.s32.totalorder %s33, 0
        // Predicated region
        $region69: #{tpu_custom_call.1} parent=47 // pred_check
          %p412 = pneg %p411
        $region70: #{tpu_custom_call.1} parent=47 // pred_check_branch
          %414 = sbr.rel (%p412) target = $region72
        $region71: #{tpu_custom_call.1} parent=47 // pred_region
          %v415 = vld [vmem:[#allocation10] sm:$0xff]
          %v416 = vld [vmem:[#allocation10 + $0x8] sm:$0xff]
          %v417 = vld [vmem:[#allocation10 + $0x10] sm:$0xff]
          %v418 = vld [vmem:[#allocation10 + $0x18] sm:$0xff]
          %v419 = vld [vmem:[%s4] sm:$0x1]
          %v420 = vld [vmem:[%s353] sm:$0xff]
          %v422 = vlaneseq
          %v423 = vshrl.u32 %v422, 7
          %v424 = vsub.s32 0, %v423
          %v425 = vrot.slane %v419, %v424
          %vm427 = vcmask 261120
          %v429 = vsel %vm427, %v420, 0
          %431 = vmatprep.subr.mxu0 0.0
          %432 = vmatpush1.msra.mxu0 %v415
          %433 = vmatprep.subr.mxu0 0.0
          %434 = vmatpush1.msra.mxu0 %v416
          %435 = vmatprep.subr.mxu0 0.0
          %436 = vmatpush1.msra.mxu0 %v417
          %437 = vmatprep.subr.mxu0 0.0
          %438 = vmatpush1.msra.mxu0 %v418
          %439 = vmatprep.subr.mxu0 0.0
          %440 = vmatpush1.msra.mxu0 0.0
          %441 = vmatprep.subr.mxu0 0.0
          %442 = vmatpush1.msra.mxu0 0.0
          %443 = vmatprep.subr.mxu0 0.0
          %444 = vmatpush1.msra.mxu0 0.0
          %445 = vmatprep.subr.mxu0 0.0
          %446 = vmatpush1.msra.mxu0 0.0
          %447 = vmatprep.subr.mxu0 0.0
          %448 = vmatpush1.msra.mxu0 0.0
          %449 = vmatprep.subr.mxu0 0.0
          %450 = vmatpush1.msra.mxu0 0.0
          %451 = vmatprep.subr.mxu0 0.0
          %452 = vmatpush1.msra.mxu0 0.0
          %453 = vmatprep.subr.mxu0 0.0
          %454 = vmatpush1.msra.mxu0 0.0
          %455 = vmatprep.subr.mxu0 0.0
          %456 = vmatpush1.msra.mxu0 0.0
          %457 = vmatprep.subr.mxu0 0.0
          %458 = vmatpush1.msra.mxu0 0.0
          %459 = vmatprep.subr.mxu0 0.0
          %460 = vmatpush1.msra.mxu0 0.0
          %461 = vmatprep.subr.mxu0 0.0
          %462 = vmatpush1.msra.mxu0 0.0
          %463 = vmatprep.subr.mxu0 0.0
          %464 = vmatpush1.msra.mxu0 0.0
          %465 = vmatprep.subr.mxu0 0.0
          %466 = vmatpush1.msra.mxu0 0.0
          %467 = vmatprep.subr.mxu0 0.0
          %468 = vmatpush1.msra.mxu0 0.0
          %469 = vmatprep.subr.mxu0 0.0
          %470 = vmatpush1.msra.mxu0 0.0
          %471 = vmatprep.subr.mxu0 0.0
          %472 = vmatpush1.msra.mxu0 0.0
          %473 = vmatprep.subr.mxu0 0.0
          %474 = vmatpush1.msra.mxu0 0.0
          %475 = vmatprep.subr.mxu0 0.0
          %476 = vmatpush1.msra.mxu0 0.0
          %477 = vmatprep.subr.mxu0 0.0
          %478 = vmatpush1.msra.mxu0 0.0
          %479 = vmatprep.subr.mxu0 0.0
          %480 = vmatpush1.msra.mxu0 0.0
          %481 = vmatprep.subr.mxu0 0.0
          %482 = vmatpush1.msra.mxu0 0.0
          %483 = vmatprep.subr.mxu0 0.0
          %484 = vmatpush1.msra.mxu0 0.0
          %485 = vmatprep.subr.mxu0 0.0
          %486 = vmatpush1.msra.mxu0 0.0
          %487 = vmatprep.subr.mxu0 0.0
          %488 = vmatpush1.msra.mxu0 0.0
          %489 = vmatprep.subr.mxu0 0.0
          %490 = vmatpush1.msra.mxu0 0.0
          %491 = vmatprep.subr.mxu0 0.0
          %492 = vmatpush1.msra.mxu0 0.0
          %493 = vmatprep.subr.mxu0 0.0
          %494 = vmatpush1.msra.mxu0 0.0
          %495 = vmatprep.mubr.f32.mxu0 0.0
          %496 = vmatmul.mubr.f32.gmra.mrb[0].mxu0 %v429
          %v497 = vpop.f32.mrb[0].mxu0
          %v498 = vadd.f32 %v425, %v497
          %v499 = vpop.f32.mrb[0].mxu0
          %500 = vdwg.mxu0
          %501 = vst.msk [vmem:[#allocation2] sm:$0xff] %vm427, %v498
          %v502 = vld [vmem:[%s362] sm:$0xff]
          %v504 = vsel %vm427, %v502, 0
          %506 = vmatprep.subr.mxu0 0.0
          %507 = vmatpush1.msra.mxu0 %v415
          %508 = vmatprep.subr.mxu0 0.0
          %509 = vmatpush1.msra.mxu0 %v416
          %510 = vmatprep.subr.mxu0 0.0
          %511 = vmatpush1.msra.mxu0 %v417
          %512 = vmatprep.subr.mxu0 0.0
          %513 = vmatpush1.msra.mxu0 %v418
          %514 = vmatprep.subr.mxu0 0.0
          %515 = vmatpush1.msra.mxu0 0.0
          %516 = vmatprep.subr.mxu0 0.0
          %517 = vmatpush1.msra.mxu0 0.0
          %518 = vmatprep.subr.mxu0 0.0
          %519 = vmatpush1.msra.mxu0 0.0
          %520 = vmatprep.subr.mxu0 0.0
          %521 = vmatpush1.msra.mxu0 0.0
          %522 = vmatprep.subr.mxu0 0.0
          %523 = vmatpush1.msra.mxu0 0.0
          %524 = vmatprep.subr.mxu0 0.0
          %525 = vmatpush1.msra.mxu0 0.0
          %526 = vmatprep.subr.mxu0 0.0
          %527 = vmatpush1.msra.mxu0 0.0
          %528 = vmatprep.subr.mxu0 0.0
          %529 = vmatpush1.msra.mxu0 0.0
          %530 = vmatprep.subr.mxu0 0.0
          %531 = vmatpush1.msra.mxu0 0.0
          %532 = vmatprep.subr.mxu0 0.0
          %533 = vmatpush1.msra.mxu0 0.0
          %534 = vmatprep.subr.mxu0 0.0
          %535 = vmatpush1.msra.mxu0 0.0
          %536 = vmatprep.subr.mxu0 0.0
          %537 = vmatpush1.msra.mxu0 0.0
          %538 = vmatprep.subr.mxu0 0.0
          %539 = vmatpush1.msra.mxu0 0.0
          %540 = vmatprep.subr.mxu0 0.0
          %541 = vmatpush1.msra.mxu0 0.0
          %542 = vmatprep.subr.mxu0 0.0
          %543 = vmatpush1.msra.mxu0 0.0
          %544 = vmatprep.subr.mxu0 0.0
          %545 = vmatpush1.msra.mxu0 0.0
          %546 = vmatprep.subr.mxu0 0.0
          %547 = vmatpush1.msra.mxu0 0.0
          %548 = vmatprep.subr.mxu0 0.0
          %549 = vmatpush1.msra.mxu0 0.0
          %550 = vmatprep.subr.mxu0 0.0
          %551 = vmatpush1.msra.mxu0 0.0
          %552 = vmatprep.subr.mxu0 0.0
          %553 = vmatpush1.msra.mxu0 0.0
          %554 = vmatprep.subr.mxu0 0.0
          %555 = vmatpush1.msra.mxu0 0.0
          %556 = vmatprep.subr.mxu0 0.0
          %557 = vmatpush1.msra.mxu0 0.0
          %558 = vmatprep.subr.mxu0 0.0
          %559 = vmatpush1.msra.mxu0 0.0
          %560 = vmatprep.subr.mxu0 0.0
          %561 = vmatpush1.msra.mxu0 0.0
          %562 = vmatprep.subr.mxu0 0.0
          %563 = vmatpush1.msra.mxu0 0.0
          %564 = vmatprep.subr.mxu0 0.0
          %565 = vmatpush1.msra.mxu0 0.0
          %566 = vmatprep.subr.mxu0 0.0
          %567 = vmatpush1.msra.mxu0 0.0
          %568 = vmatprep.subr.mxu0 0.0
          %569 = vmatpush1.msra.mxu0 0.0
          %570 = vmatprep.mubr.f32.mxu0 0.0
          %571 = vmatmul.mubr.f32.gmra.mrb[0].mxu0 %v504
          %v572 = vpop.f32.mrb[0].mxu0
          %v573 = vadd.f32 %v425, %v572
          %v574 = vpop.f32.mrb[0].mxu0
          %575 = vdwg.mxu0
          %576 = vst.msk [vmem:[#allocation3] sm:$0xff] %vm427, %v573
        $region72: #{tpu_custom_call.1} parent=47 // pred_fallthru
          _
        %v577 = vld [vmem:[%s344] sm:$0xff]
        %v578 = vld [vmem:[#allocation10] sm:$0xff]
        %v579 = vld [vmem:[#allocation10 + $0x8] sm:$0xff]
        %v580 = vld [vmem:[#allocation10 + $0x10] sm:$0xff]
        %v581 = vld [vmem:[#allocation10 + $0x18] sm:$0xff]
        %v582 = vld [vmem:[%s4] sm:$0x1]
        %v584 = vlaneseq
        %v585 = vshrl.u32 %v584, 7
        %v586 = vsub.s32 0, %v585
        %v587 = vrot.slane %v582, %v586
        %vm589 = vcmask 261120
        %v591 = vsel %vm589, %v577, 0
        %593 = vmatprep.subr.mxu0 0.0
        %594 = vmatpush1.msra.mxu0 %v578
        %595 = vmatprep.subr.mxu0 0.0
        %596 = vmatpush1.msra.mxu0 %v579
        %597 = vmatprep.subr.mxu0 0.0
        %598 = vmatpush1.msra.mxu0 %v580
        %599 = vmatprep.subr.mxu0 0.0
        %600 = vmatpush1.msra.mxu0 %v581
        %601 = vmatprep.subr.mxu0 0.0
        %602 = vmatpush1.msra.mxu0 0.0
        %603 = vmatprep.subr.mxu0 0.0
        %604 = vmatpush1.msra.mxu0 0.0
        %605 = vmatprep.subr.mxu0 0.0
        %606 = vmatpush1.msra.mxu0 0.0
        %607 = vmatprep.subr.mxu0 0.0
        %608 = vmatpush1.msra.mxu0 0.0
        %609 = vmatprep.subr.mxu0 0.0
        %610 = vmatpush1.msra.mxu0 0.0
        %611 = vmatprep.subr.mxu0 0.0
        %612 = vmatpush1.msra.mxu0 0.0
        %613 = vmatprep.subr.mxu0 0.0
        %614 = vmatpush1.msra.mxu0 0.0
        %615 = vmatprep.subr.mxu0 0.0
        %616 = vmatpush1.msra.mxu0 0.0
        %617 = vmatprep.subr.mxu0 0.0
        %618 = vmatpush1.msra.mxu0 0.0
        %619 = vmatprep.subr.mxu0 0.0
        %620 = vmatpush1.msra.mxu0 0.0
        %621 = vmatprep.subr.mxu0 0.0
        %622 = vmatpush1.msra.mxu0 0.0
        %623 = vmatprep.subr.mxu0 0.0
        %624 = vmatpush1.msra.mxu0 0.0
        %625 = vmatprep.subr.mxu0 0.0
        %626 = vmatpush1.msra.mxu0 0.0
        %627 = vmatprep.subr.mxu0 0.0
        %628 = vmatpush1.msra.mxu0 0.0
        %629 = vmatprep.subr.mxu0 0.0
        %630 = vmatpush1.msra.mxu0 0.0
        %631 = vmatprep.subr.mxu0 0.0
        %632 = vmatpush1.msra.mxu0 0.0
        %633 = vmatprep.subr.mxu0 0.0
        %634 = vmatpush1.msra.mxu0 0.0
        %635 = vmatprep.subr.mxu0 0.0
        %636 = vmatpush1.msra.mxu0 0.0
        %637 = vmatprep.subr.mxu0 0.0
        %638 = vmatpush1.msra.mxu0 0.0
        %639 = vmatprep.subr.mxu0 0.0
        %640 = vmatpush1.msra.mxu0 0.0
        %641 = vmatprep.subr.mxu0 0.0
        %642 = vmatpush1.msra.mxu0 0.0
        %643 = vmatprep.subr.mxu0 0.0
        %644 = vmatpush1.msra.mxu0 0.0
        %645 = vmatprep.subr.mxu0 0.0
        %646 = vmatpush1.msra.mxu0 0.0
        %647 = vmatprep.subr.mxu0 0.0
        %648 = vmatpush1.msra.mxu0 0.0
        %649 = vmatprep.subr.mxu0 0.0
        %650 = vmatpush1.msra.mxu0 0.0
        %651 = vmatprep.subr.mxu0 0.0
        %652 = vmatpush1.msra.mxu0 0.0
        %653 = vmatprep.subr.mxu0 0.0
        %654 = vmatpush1.msra.mxu0 0.0
        %655 = vmatprep.subr.mxu0 0.0
        %656 = vmatpush1.msra.mxu0 0.0
        %657 = vmatprep.mubr.f32.mxu0 0.0
        %658 = vmatmul.mubr.f32.gmra.mrb[0].mxu0 %v591
        %v659 = vpop.f32.mrb[0].mxu0
        %v660 = vadd.f32 %v587, %v659
        %v661 = vpop.f32.mrb[0].mxu0
        %662 = vdwg.mxu0
        %v663 = vmul.f32 %v660, 0.35355338
        %v664 = vld [vmem:[#allocation2] sm:$0xff]
        %v665 = vld [vmem:[#allocation3] sm:$0xff]
        %vm666 = vcmask 64512
        %v668 = vsel %vm666, %v663, 0
        %v671 = vsel %vm666, %v664, 0
        %673 = vmatprep.subr.mxu0 0.0
        %674 = vmatpush1.xpose.msra.mxu0 %v671
        %675 = vmatprep.subr.mxu0 0.0
        %676 = vmatpush1.xpose.msra.mxu0 0.0
        %677 = vmatprep.subr.mxu0 0.0
        %678 = vmatpush1.xpose.msra.mxu0 0.0
        %679 = vmatprep.subr.mxu0 0.0
        %680 = vmatpush1.xpose.msra.mxu0 0.0
        %681 = vmatprep.subr.mxu0 0.0
        %682 = vmatpush1.xpose.msra.mxu0 0.0
        %683 = vmatprep.subr.mxu0 0.0
        %684 = vmatpush1.xpose.msra.mxu0 0.0
        %685 = vmatprep.subr.mxu0 0.0
        %686 = vmatpush1.xpose.msra.mxu0 0.0
        %687 = vmatprep.subr.mxu0 0.0
        %688 = vmatpush1.xpose.msra.mxu0 0.0
        %689 = vmatprep.subr.mxu0 0.0
        %690 = vmatpush1.xpose.msra.mxu0 0.0
        %691 = vmatprep.subr.mxu0 0.0
        %692 = vmatpush1.xpose.msra.mxu0 0.0
        %693 = vmatprep.subr.mxu0 0.0
        %694 = vmatpush1.xpose.msra.mxu0 0.0
        %695 = vmatprep.subr.mxu0 0.0
        %696 = vmatpush1.xpose.msra.mxu0 0.0
        %697 = vmatprep.subr.mxu0 0.0
        %698 = vmatpush1.xpose.msra.mxu0 0.0
        %699 = vmatprep.subr.mxu0 0.0
        %700 = vmatpush1.xpose.msra.mxu0 0.0
        %701 = vmatprep.subr.mxu0 0.0
        %702 = vmatpush1.xpose.msra.mxu0 0.0
        %703 = vmatprep.subr.mxu0 0.0
        %704 = vmatpush1.xpose.msra.mxu0 0.0
        %705 = vmatprep.subr.mxu0 0.0
        %706 = vmatpush1.xpose.msra.mxu0 0.0
        %707 = vmatprep.subr.mxu0 0.0
        %708 = vmatpush1.xpose.msra.mxu0 0.0
        %709 = vmatprep.subr.mxu0 0.0
        %710 = vmatpush1.xpose.msra.mxu0 0.0
        %711 = vmatprep.subr.mxu0 0.0
        %712 = vmatpush1.xpose.msra.mxu0 0.0
        %713 = vmatprep.subr.mxu0 0.0
        %714 = vmatpush1.xpose.msra.mxu0 0.0
        %715 = vmatprep.subr.mxu0 0.0
        %716 = vmatpush1.xpose.msra.mxu0 0.0
        %717 = vmatprep.subr.mxu0 0.0
        %718 = vmatpush1.xpose.msra.mxu0 0.0
        %719 = vmatprep.subr.mxu0 0.0
        %720 = vmatpush1.xpose.msra.mxu0 0.0
        %721 = vmatprep.subr.mxu0 0.0
        %722 = vmatpush1.xpose.msra.mxu0 0.0
        %723 = vmatprep.subr.mxu0 0.0
        %724 = vmatpush1.xpose.msra.mxu0 0.0
        %725 = vmatprep.subr.mxu0 0.0
        %726 = vmatpush1.xpose.msra.mxu0 0.0
        %727 = vmatprep.subr.mxu0 0.0
        %728 = vmatpush1.xpose.msra.mxu0 0.0
        %729 = vmatprep.subr.mxu0 0.0
        %730 = vmatpush1.xpose.msra.mxu0 0.0
        %731 = vmatprep.subr.mxu0 0.0
        %732 = vmatpush1.xpose.msra.mxu0 0.0
        %733 = vmatprep.subr.mxu0 0.0
        %734 = vmatpush1.xpose.msra.mxu0 0.0
        %735 = vmatprep.subr.mxu0 0.0
        %736 = vmatpush1.xpose.msra.mxu0 0.0
        %737 = vmatprep.mubr.f32.mxu0 0.0
        %738 = vmatmul.mubr.f32.gmra.mrb[0].mxu0 %v668
        %v739 = vpop.f32.mrb[0].mxu0
        %v740 = vadd.f32 0.0, %v739
        %v741 = vpop.f32.mrb[0].mxu0
        %742 = vdwg.mxu0
        %v743 = vsel %vm666, %v740, -inf
        %744 = vmax.xlane.f32.xlu0 %v743
        %v745 = vpop.xlane.xlu0 %744
        %v746 = vsub.f32 %v740, %v745
        %v747 = vmul.f32 %v746, 1.442695
        %v748 = vpow.pop %v747
        %v749 = vsel %vm666, %v748, 0.0
        %750 = vadd.xlane.f32.xlu0 %v749
        %v751 = vpop.xlane.xlu0 %750
        %v753 = vsel %vm666, %v748, 0
        %755 = vmatprep.subr.mxu0 0.0
        %756 = vmatpush1.msra.mxu0 %v665
        %757 = vmatprep.subr.mxu0 0.0
        %758 = vmatpush1.msra.mxu0 0.0
        %759 = vmatprep.subr.mxu0 0.0
        %760 = vmatpush1.msra.mxu0 0.0
        %761 = vmatprep.subr.mxu0 0.0
        %762 = vmatpush1.msra.mxu0 0.0
        %763 = vmatprep.subr.mxu0 0.0
        %764 = vmatpush1.msra.mxu0 0.0
        %765 = vmatprep.subr.mxu0 0.0
        %766 = vmatpush1.msra.mxu0 0.0
        %767 = vmatprep.subr.mxu0 0.0
        %768 = vmatpush1.msra.mxu0 0.0
        %769 = vmatprep.subr.mxu0 0.0
        %770 = vmatpush1.msra.mxu0 0.0
        %771 = vmatprep.subr.mxu0 0.0
        %772 = vmatpush1.msra.mxu0 0.0
        %773 = vmatprep.subr.mxu0 0.0
        %774 = vmatpush1.msra.mxu0 0.0
        %775 = vmatprep.subr.mxu0 0.0
        %776 = vmatpush1.msra.mxu0 0.0
        %777 = vmatprep.subr.mxu0 0.0
        %778 = vmatpush1.msra.mxu0 0.0
        %779 = vmatprep.subr.mxu0 0.0
        %780 = vmatpush1.msra.mxu0 0.0
        %781 = vmatprep.subr.mxu0 0.0
        %782 = vmatpush1.msra.mxu0 0.0
        %783 = vmatprep.subr.mxu0 0.0
        %784 = vmatpush1.msra.mxu0 0.0
        %785 = vmatprep.subr.mxu0 0.0
        %786 = vmatpush1.msra.mxu0 0.0
        %787 = vmatprep.subr.mxu0 0.0
        %788 = vmatpush1.msra.mxu0 0.0
        %789 = vmatprep.subr.mxu0 0.0
        %790 = vmatpush1.msra.mxu0 0.0
        %791 = vmatprep.subr.mxu0 0.0
        %792 = vmatpush1.msra.mxu0 0.0
        %793 = vmatprep.subr.mxu0 0.0
        %794 = vmatpush1.msra.mxu0 0.0
        %795 = vmatprep.subr.mxu0 0.0
        %796 = vmatpush1.msra.mxu0 0.0
        %797 = vmatprep.subr.mxu0 0.0
        %798 = vmatpush1.msra.mxu0 0.0
        %799 = vmatprep.subr.mxu0 0.0
        %800 = vmatpush1.msra.mxu0 0.0
        %801 = vmatprep.subr.mxu0 0.0
        %802 = vmatpush1.msra.mxu0 0.0
        %803 = vmatprep.subr.mxu0 0.0
        %804 = vmatpush1.msra.mxu0 0.0
        %805 = vmatprep.subr.mxu0 0.0
        %806 = vmatpush1.msra.mxu0 0.0
        %807 = vmatprep.subr.mxu0 0.0
        %808 = vmatpush1.msra.mxu0 0.0
        %809 = vmatprep.subr.mxu0 0.0
        %810 = vmatpush1.msra.mxu0 0.0
        %811 = vmatprep.subr.mxu0 0.0
        %812 = vmatpush1.msra.mxu0 0.0
        %813 = vmatprep.subr.mxu0 0.0
        %814 = vmatpush1.msra.mxu0 0.0
        %815 = vmatprep.subr.mxu0 0.0
        %816 = vmatpush1.msra.mxu0 0.0
        %817 = vmatprep.subr.mxu0 0.0
        %818 = vmatpush1.msra.mxu0 0.0
        %819 = vmatprep.mubr.f32.mxu0 0.0
        %820 = vmatmul.mubr.f32.gmra.mrb[0].mxu0 %v753
        %v821 = vpop.f32.mrb[0].mxu0
        %v822 = vadd.f32 0.0, %v821
        %v823 = vpop.f32.mrb[0].mxu0
        %824 = vdwg.mxu0
        %v825 = vrcp.pop %v751
        %v826 = vmul.f32 %v822, %v825
        %827 = vrot.lane.b32.xlu0 %v663, 120
        %v828 = vpop.permute.xlu0 %827
        %829 = vrot.lane.b32.xlu0 %v664, 120
        %v830 = vpop.permute.xlu0 %829
        %v831 = vsel %vm666, %v828, 0
        %v833 = vsel %vm666, %v830, 0
        %835 = vmatprep.subr.mxu0 0.0
        %836 = vmatpush1.xpose.msra.mxu0 %v833
        %837 = vmatprep.subr.mxu0 0.0
        %838 = vmatpush1.xpose.msra.mxu0 0.0
        %839 = vmatprep.subr.mxu0 0.0
        %840 = vmatpush1.xpose.msra.mxu0 0.0
        %841 = vmatprep.subr.mxu0 0.0
        %842 = vmatpush1.xpose.msra.mxu0 0.0
        %843 = vmatprep.subr.mxu0 0.0
        %844 = vmatpush1.xpose.msra.mxu0 0.0
        %845 = vmatprep.subr.mxu0 0.0
        %846 = vmatpush1.xpose.msra.mxu0 0.0
        %847 = vmatprep.subr.mxu0 0.0
        %848 = vmatpush1.xpose.msra.mxu0 0.0
        %849 = vmatprep.subr.mxu0 0.0
        %850 = vmatpush1.xpose.msra.mxu0 0.0
        %851 = vmatprep.subr.mxu0 0.0
        %852 = vmatpush1.xpose.msra.mxu0 0.0
        %853 = vmatprep.subr.mxu0 0.0
        %854 = vmatpush1.xpose.msra.mxu0 0.0
        %855 = vmatprep.subr.mxu0 0.0
        %856 = vmatpush1.xpose.msra.mxu0 0.0
        %857 = vmatprep.subr.mxu0 0.0
        %858 = vmatpush1.xpose.msra.mxu0 0.0
        %859 = vmatprep.subr.mxu0 0.0
        %860 = vmatpush1.xpose.msra.mxu0 0.0
        %861 = vmatprep.subr.mxu0 0.0
        %862 = vmatpush1.xpose.msra.mxu0 0.0
        %863 = vmatprep.subr.mxu0 0.0
        %864 = vmatpush1.xpose.msra.mxu0 0.0
        %865 = vmatprep.subr.mxu0 0.0
        %866 = vmatpush1.xpose.msra.mxu0 0.0
        %867 = vmatprep.subr.mxu0 0.0
        %868 = vmatpush1.xpose.msra.mxu0 0.0
        %869 = vmatprep.subr.mxu0 0.0
        %870 = vmatpush1.xpose.msra.mxu0 0.0
        %871 = vmatprep.subr.mxu0 0.0
        %872 = vmatpush1.xpose.msra.mxu0 0.0
        %873 = vmatprep.subr.mxu0 0.0
        %874 = vmatpush1.xpose.msra.mxu0 0.0
        %875 = vmatprep.subr.mxu0 0.0
        %876 = vmatpush1.xpose.msra.mxu0 0.0
        %877 = vmatprep.subr.mxu0 0.0
        %878 = vmatpush1.xpose.msra.mxu0 0.0
        %879 = vmatprep.subr.mxu0 0.0
        %880 = vmatpush1.xpose.msra.mxu0 0.0
        %881 = vmatprep.subr.mxu0 0.0
        %882 = vmatpush1.xpose.msra.mxu0 0.0
        %883 = vmatprep.subr.mxu0 0.0
        %884 = vmatpush1.xpose.msra.mxu0 0.0
        %885 = vmatprep.subr.mxu0 0.0
        %886 = vmatpush1.xpose.msra.mxu0 0.0
        %887 = vmatprep.subr.mxu0 0.0
        %888 = vmatpush1.xpose.msra.mxu0 0.0
        %889 = vmatprep.subr.mxu0 0.0
        %890 = vmatpush1.xpose.msra.mxu0 0.0
        %891 = vmatprep.subr.mxu0 0.0
        %892 = vmatpush1.xpose.msra.mxu0 0.0
        %893 = vmatprep.subr.mxu0 0.0
        %894 = vmatpush1.xpose.msra.mxu0 0.0
        %895 = vmatprep.subr.mxu0 0.0
        %896 = vmatpush1.xpose.msra.mxu0 0.0
        %897 = vmatprep.subr.mxu0 0.0
        %898 = vmatpush1.xpose.msra.mxu0 0.0
        %899 = vmatprep.mubr.f32.mxu0 0.0
        %900 = vmatmul.mubr.f32.gmra.mrb[0].mxu0 %v831
        %v901 = vpop.f32.mrb[0].mxu0
        %v902 = vadd.f32 0.0, %v901
        %v903 = vpop.f32.mrb[0].mxu0
        %904 = vdwg.mxu0
        %v905 = vsel %vm666, %v902, -inf
        %906 = vmax.xlane.f32.xlu0 %v905
        %v907 = vpop.xlane.xlu0 %906
        %v908 = vsub.f32 %v902, %v907
        %v909 = vmul.f32 %v908, 1.442695
        %v910 = vpow.pop %v909
        %v911 = vsel %vm666, %v910, 0.0
        %912 = vadd.xlane.f32.xlu0 %v911
        %v913 = vpop.xlane.xlu0 %912
        %915 = vrot.lane.b32.xlu0 %v665, 120
        %v916 = vpop.permute.xlu0 %915
        %v919 = vsel %vm666, %v910, 0
        %921 = vmatprep.subr.mxu0 0.0
        %922 = vmatpush1.msra.mxu0 %v916
        %923 = vmatprep.subr.mxu0 0.0
        %924 = vmatpush1.msra.mxu0 0.0
        %925 = vmatprep.subr.mxu0 0.0
        %926 = vmatpush1.msra.mxu0 0.0
        %927 = vmatprep.subr.mxu0 0.0
        %928 = vmatpush1.msra.mxu0 0.0
        %929 = vmatprep.subr.mxu0 0.0
        %930 = vmatpush1.msra.mxu0 0.0
        %931 = vmatprep.subr.mxu0 0.0
        %932 = vmatpush1.msra.mxu0 0.0
        %933 = vmatprep.subr.mxu0 0.0
        %934 = vmatpush1.msra.mxu0 0.0
        %935 = vmatprep.subr.mxu0 0.0
        %936 = vmatpush1.msra.mxu0 0.0
        %937 = vmatprep.subr.mxu0 0.0
        %938 = vmatpush1.msra.mxu0 0.0
        %939 = vmatprep.subr.mxu0 0.0
        %940 = vmatpush1.msra.mxu0 0.0
        %941 = vmatprep.subr.mxu0 0.0
        %942 = vmatpush1.msra.mxu0 0.0
        %943 = vmatprep.subr.mxu0 0.0
        %944 = vmatpush1.msra.mxu0 0.0
        %945 = vmatprep.subr.mxu0 0.0
        %946 = vmatpush1.msra.mxu0 0.0
        %947 = vmatprep.subr.mxu0 0.0
        %948 = vmatpush1.msra.mxu0 0.0
        %949 = vmatprep.subr.mxu0 0.0
        %950 = vmatpush1.msra.mxu0 0.0
        %951 = vmatprep.subr.mxu0 0.0
        %952 = vmatpush1.msra.mxu0 0.0
        %953 = vmatprep.subr.mxu0 0.0
        %954 = vmatpush1.msra.mxu0 0.0
        %955 = vmatprep.subr.mxu0 0.0
        %956 = vmatpush1.msra.mxu0 0.0
        %957 = vmatprep.subr.mxu0 0.0
        %958 = vmatpush1.msra.mxu0 0.0
        %959 = vmatprep.subr.mxu0 0.0
        %960 = vmatpush1.msra.mxu0 0.0
        %961 = vmatprep.subr.mxu0 0.0
        %962 = vmatpush1.msra.mxu0 0.0
        %963 = vmatprep.subr.mxu0 0.0
        %964 = vmatpush1.msra.mxu0 0.0
        %965 = vmatprep.subr.mxu0 0.0
        %966 = vmatpush1.msra.mxu0 0.0
        %967 = vmatprep.subr.mxu0 0.0
        %968 = vmatpush1.msra.mxu0 0.0
        %969 = vmatprep.subr.mxu0 0.0
        %970 = vmatpush1.msra.mxu0 0.0
        %971 = vmatprep.subr.mxu0 0.0
        %972 = vmatpush1.msra.mxu0 0.0
        %973 = vmatprep.subr.mxu0 0.0
        %974 = vmatpush1.msra.mxu0 0.0
        %975 = vmatprep.subr.mxu0 0.0
        %976 = vmatpush1.msra.mxu0 0.0
        %977 = vmatprep.subr.mxu0 0.0
        %978 = vmatpush1.msra.mxu0 0.0
        %979 = vmatprep.subr.mxu0 0.0
        %980 = vmatpush1.msra.mxu0 0.0
        %981 = vmatprep.subr.mxu0 0.0
        %982 = vmatpush1.msra.mxu0 0.0
        %983 = vmatprep.subr.mxu0 0.0
        %984 = vmatpush1.msra.mxu0 0.0
        %985 = vmatprep.mubr.f32.mxu0 0.0
        %986 = vmatmul.mubr.f32.gmra.mrb[0].mxu0 %v919
        %v987 = vpop.f32.mrb[0].mxu0
        %v988 = vadd.f32 0.0, %v987
        %v989 = vpop.f32.mrb[0].mxu0
        %990 = vdwg.mxu0
        %v991 = vrcp.pop %v913
        %v992 = vmul.f32 %v988, %v991
        %993 = vrot.lane.b32.xlu0 %v663, 112
        %v994 = vpop.permute.xlu0 %993
        %995 = vrot.lane.b32.xlu0 %v664, 112
        %v996 = vpop.permute.xlu0 %995
        %v997 = vsel %vm666, %v994, 0
        %v999 = vsel %vm666, %v996, 0
        %1001 = vmatprep.subr.mxu0 0.0
        %1002 = vmatpush1.xpose.msra.mxu0 %v999
        %1003 = vmatprep.subr.mxu0 0.0
        %1004 = vmatpush1.xpose.msra.mxu0 0.0
        %1005 = vmatprep.subr.mxu0 0.0
        %1006 = vmatpush1.xpose.msra.mxu0 0.0
        %1007 = vmatprep.subr.mxu0 0.0
        %1008 = vmatpush1.xpose.msra.mxu0 0.0
        %1009 = vmatprep.subr.mxu0 0.0
        %1010 = vmatpush1.xpose.msra.mxu0 0.0
        %1011 = vmatprep.subr.mxu0 0.0
        %1012 = vmatpush1.xpose.msra.mxu0 0.0
        %1013 = vmatprep.subr.mxu0 0.0
        %1014 = vmatpush1.xpose.msra.mxu0 0.0
        %1015 = vmatprep.subr.mxu0 0.0
        %1016 = vmatpush1.xpose.msra.mxu0 0.0
        %1017 = vmatprep.subr.mxu0 0.0
        %1018 = vmatpush1.xpose.msra.mxu0 0.0
        %1019 = vmatprep.subr.mxu0 0.0
        %1020 = vmatpush1.xpose.msra.mxu0 0.0
        %1021 = vmatprep.subr.mxu0 0.0
        %1022 = vmatpush1.xpose.msra.mxu0 0.0
        %1023 = vmatprep.subr.mxu0 0.0
        %1024 = vmatpush1.xpose.msra.mxu0 0.0
        %1025 = vmatprep.subr.mxu0 0.0
        %1026 = vmatpush1.xpose.msra.mxu0 0.0
        %1027 = vmatprep.subr.mxu0 0.0
        %1028 = vmatpush1.xpose.msra.mxu0 0.0
        %1029 = vmatprep.subr.mxu0 0.0
        %1030 = vmatpush1.xpose.msra.mxu0 0.0
        %1031 = vmatprep.subr.mxu0 0.0
        %1032 = vmatpush1.xpose.msra.mxu0 0.0
        %1033 = vmatprep.subr.mxu0 0.0
        %1034 = vmatpush1.xpose.msra.mxu0 0.0
        %1035 = vmatprep.subr.mxu0 0.0
        %1036 = vmatpush1.xpose.msra.mxu0 0.0
        %1037 = vmatprep.subr.mxu0 0.0
        %1038 = vmatpush1.xpose.msra.mxu0 0.0
        %1039 = vmatprep.subr.mxu0 0.0
        %1040 = vmatpush1.xpose.msra.mxu0 0.0
        %1041 = vmatprep.subr.mxu0 0.0
        %1042 = vmatpush1.xpose.msra.mxu0 0.0
        %1043 = vmatprep.subr.mxu0 0.0
        %1044 = vmatpush1.xpose.msra.mxu0 0.0
        %1045 = vmatprep.subr.mxu0 0.0
        %1046 = vmatpush1.xpose.msra.mxu0 0.0
        %1047 = vmatprep.subr.mxu0 0.0
        %1048 = vmatpush1.xpose.msra.mxu0 0.0
        %1049 = vmatprep.subr.mxu0 0.0
        %1050 = vmatpush1.xpose.msra.mxu0 0.0
        %1051 = vmatprep.subr.mxu0 0.0
        %1052 = vmatpush1.xpose.msra.mxu0 0.0
        %1053 = vmatprep.subr.mxu0 0.0
        %1054 = vmatpush1.xpose.msra.mxu0 0.0
        %1055 = vmatprep.subr.mxu0 0.0
        %1056 = vmatpush1.xpose.msra.mxu0 0.0
        %1057 = vmatprep.subr.mxu0 0.0
        %1058 = vmatpush1.xpose.msra.mxu0 0.0
        %1059 = vmatprep.subr.mxu0 0.0
        %1060 = vmatpush1.xpose.msra.mxu0 0.0
        %1061 = vmatprep.subr.mxu0 0.0
        %1062 = vmatpush1.xpose.msra.mxu0 0.0
        %1063 = vmatprep.subr.mxu0 0.0
        %1064 = vmatpush1.xpose.msra.mxu0 0.0
        %1065 = vmatprep.mubr.f32.mxu0 0.0
        %1066 = vmatmul.mubr.f32.gmra.mrb[0].mxu0 %v997
        %v1067 = vpop.f32.mrb[0].mxu0
        %v1068 = vadd.f32 0.0, %v1067
        %v1069 = vpop.f32.mrb[0].mxu0
        %1070 = vdwg.mxu0
        %v1071 = vsel %vm666, %v1068, -inf
        %1072 = vmax.xlane.f32.xlu0 %v1071
        %v1073 = vpop.xlane.xlu0 %1072
        %v1074 = vsub.f32 %v1068, %v1073
        %v1075 = vmul.f32 %v1074, 1.442695
        %v1076 = vpow.pop %v1075
        %v1077 = vsel %vm666, %v1076, 0.0
        %1078 = vadd.xlane.f32.xlu0 %v1077
        %v1079 = vpop.xlane.xlu0 %1078
        %1080 = vrot.lane.b32.xlu0 %v665, 112
        %v1081 = vpop.permute.xlu0 %1080
        %v1084 = vsel %vm666, %v1076, 0
        %1086 = vmatprep.subr.mxu0 0.0
        %1087 = vmatpush1.msra.mxu0 %v1081
        %1088 = vmatprep.subr.mxu0 0.0
        %1089 = vmatpush1.msra.mxu0 0.0
        %1090 = vmatprep.subr.mxu0 0.0
        %1091 = vmatpush1.msra.mxu0 0.0
        %1092 = vmatprep.subr.mxu0 0.0
        %1093 = vmatpush1.msra.mxu0 0.0
        %1094 = vmatprep.subr.mxu0 0.0
        %1095 = vmatpush1.msra.mxu0 0.0
        %1096 = vmatprep.subr.mxu0 0.0
        %1097 = vmatpush1.msra.mxu0 0.0
        %1098 = vmatprep.subr.mxu0 0.0
        %1099 = vmatpush1.msra.mxu0 0.0
        %1100 = vmatprep.subr.mxu0 0.0
        %1101 = vmatpush1.msra.mxu0 0.0
        %1102 = vmatprep.subr.mxu0 0.0
        %1103 = vmatpush1.msra.mxu0 0.0
        %1104 = vmatprep.subr.mxu0 0.0
        %1105 = vmatpush1.msra.mxu0 0.0
        %1106 = vmatprep.subr.mxu0 0.0
        %1107 = vmatpush1.msra.mxu0 0.0
        %1108 = vmatprep.subr.mxu0 0.0
        %1109 = vmatpush1.msra.mxu0 0.0
        %1110 = vmatprep.subr.mxu0 0.0
        %1111 = vmatpush1.msra.mxu0 0.0
        %1112 = vmatprep.subr.mxu0 0.0
        %1113 = vmatpush1.msra.mxu0 0.0
        %1114 = vmatprep.subr.mxu0 0.0
        %1115 = vmatpush1.msra.mxu0 0.0
        %1116 = vmatprep.subr.mxu0 0.0
        %1117 = vmatpush1.msra.mxu0 0.0
        %1118 = vmatprep.subr.mxu0 0.0
        %1119 = vmatpush1.msra.mxu0 0.0
        %1120 = vmatprep.subr.mxu0 0.0
        %1121 = vmatpush1.msra.mxu0 0.0
        %1122 = vmatprep.subr.mxu0 0.0
        %1123 = vmatpush1.msra.mxu0 0.0
        %1124 = vmatprep.subr.mxu0 0.0
        %1125 = vmatpush1.msra.mxu0 0.0
        %1126 = vmatprep.subr.mxu0 0.0
        %1127 = vmatpush1.msra.mxu0 0.0
        %1128 = vmatprep.subr.mxu0 0.0
        %1129 = vmatpush1.msra.mxu0 0.0
        %1130 = vmatprep.subr.mxu0 0.0
        %1131 = vmatpush1.msra.mxu0 0.0
        %1132 = vmatprep.subr.mxu0 0.0
        %1133 = vmatpush1.msra.mxu0 0.0
        %1134 = vmatprep.subr.mxu0 0.0
        %1135 = vmatpush1.msra.mxu0 0.0
        %1136 = vmatprep.subr.mxu0 0.0
        %1137 = vmatpush1.msra.mxu0 0.0
        %1138 = vmatprep.subr.mxu0 0.0
        %1139 = vmatpush1.msra.mxu0 0.0
        %1140 = vmatprep.subr.mxu0 0.0
        %1141 = vmatpush1.msra.mxu0 0.0
        %1142 = vmatprep.subr.mxu0 0.0
        %1143 = vmatpush1.msra.mxu0 0.0
        %1144 = vmatprep.subr.mxu0 0.0
        %1145 = vmatpush1.msra.mxu0 0.0
        %1146 = vmatprep.subr.mxu0 0.0
        %1147 = vmatpush1.msra.mxu0 0.0
        %1148 = vmatprep.subr.mxu0 0.0
        %1149 = vmatpush1.msra.mxu0 0.0
        %1150 = vmatprep.mubr.f32.mxu0 0.0
        %1151 = vmatmul.mubr.f32.gmra.mrb[0].mxu0 %v1084
        %v1152 = vpop.f32.mrb[0].mxu0
        %v1153 = vadd.f32 0.0, %v1152
        %v1154 = vpop.f32.mrb[0].mxu0
        %1155 = vdwg.mxu0
        %v1156 = vrcp.pop %v1079
        %v1157 = vmul.f32 %v1153, %v1156
        %1158 = vrot.lane.b32.xlu0 %v663, 104
        %v1159 = vpop.permute.xlu0 %1158
        %1160 = vrot.lane.b32.xlu0 %v664, 104
        %v1161 = vpop.permute.xlu0 %1160
        %v1162 = vsel %vm666, %v1159, 0
        %v1164 = vsel %vm666, %v1161, 0
        %1166 = vmatprep.subr.mxu0 0.0
        %1167 = vmatpush1.xpose.msra.mxu0 %v1164
        %1168 = vmatprep.subr.mxu0 0.0
        %1169 = vmatpush1.xpose.msra.mxu0 0.0
        %1170 = vmatprep.subr.mxu0 0.0
        %1171 = vmatpush1.xpose.msra.mxu0 0.0
        %1172 = vmatprep.subr.mxu0 0.0
        %1173 = vmatpush1.xpose.msra.mxu0 0.0
        %1174 = vmatprep.subr.mxu0 0.0
        %1175 = vmatpush1.xpose.msra.mxu0 0.0
        %1176 = vmatprep.subr.mxu0 0.0
        %1177 = vmatpush1.xpose.msra.mxu0 0.0
        %1178 = vmatprep.subr.mxu0 0.0
        %1179 = vmatpush1.xpose.msra.mxu0 0.0
        %1180 = vmatprep.subr.mxu0 0.0
        %1181 = vmatpush1.xpose.msra.mxu0 0.0
        %1182 = vmatprep.subr.mxu0 0.0
        %1183 = vmatpush1.xpose.msra.mxu0 0.0
        %1184 = vmatprep.subr.mxu0 0.0
        %1185 = vmatpush1.xpose.msra.mxu0 0.0
        %1186 = vmatprep.subr.mxu0 0.0
        %1187 = vmatpush1.xpose.msra.mxu0 0.0
        %1188 = vmatprep.subr.mxu0 0.0
        %1189 = vmatpush1.xpose.msra.mxu0 0.0
        %1190 = vmatprep.subr.mxu0 0.0
        %1191 = vmatpush1.xpose.msra.mxu0 0.0
        %1192 = vmatprep.subr.mxu0 0.0
        %1193 = vmatpush1.xpose.msra.mxu0 0.0
        %1194 = vmatprep.subr.mxu0 0.0
        %1195 = vmatpush1.xpose.msra.mxu0 0.0
        %1196 = vmatprep.subr.mxu0 0.0
        %1197 = vmatpush1.xpose.msra.mxu0 0.0
        %1198 = vmatprep.subr.mxu0 0.0
        %1199 = vmatpush1.xpose.msra.mxu0 0.0
        %1200 = vmatprep.subr.mxu0 0.0
        %1201 = vmatpush1.xpose.msra.mxu0 0.0
        %1202 = vmatprep.subr.mxu0 0.0
        %1203 = vmatpush1.xpose.msra.mxu0 0.0
        %1204 = vmatprep.subr.mxu0 0.0
        %1205 = vmatpush1.xpose.msra.mxu0 0.0
        %1206 = vmatprep.subr.mxu0 0.0
        %1207 = vmatpush1.xpose.msra.mxu0 0.0
        %1208 = vmatprep.subr.mxu0 0.0
        %1209 = vmatpush1.xpose.msra.mxu0 0.0
        %1210 = vmatprep.subr.mxu0 0.0
        %1211 = vmatpush1.xpose.msra.mxu0 0.0
        %1212 = vmatprep.subr.mxu0 0.0
        %1213 = vmatpush1.xpose.msra.mxu0 0.0
        %1214 = vmatprep.subr.mxu0 0.0
        %1215 = vmatpush1.xpose.msra.mxu0 0.0
        %1216 = vmatprep.subr.mxu0 0.0
        %1217 = vmatpush1.xpose.msra.mxu0 0.0
        %1218 = vmatprep.subr.mxu0 0.0
        %1219 = vmatpush1.xpose.msra.mxu0 0.0
        %1220 = vmatprep.subr.mxu0 0.0
        %1221 = vmatpush1.xpose.msra.mxu0 0.0
        %1222 = vmatprep.subr.mxu0 0.0
        %1223 = vmatpush1.xpose.msra.mxu0 0.0
        %1224 = vmatprep.subr.mxu0 0.0
        %1225 = vmatpush1.xpose.msra.mxu0 0.0
        %1226 = vmatprep.subr.mxu0 0.0
        %1227 = vmatpush1.xpose.msra.mxu0 0.0
        %1228 = vmatprep.subr.mxu0 0.0
        %1229 = vmatpush1.xpose.msra.mxu0 0.0
        %1230 = vmatprep.mubr.f32.mxu0 0.0
        %1231 = vmatmul.mubr.f32.gmra.mrb[0].mxu0 %v1162
        %v1232 = vpop.f32.mrb[0].mxu0
        %v1233 = vadd.f32 0.0, %v1232
        %v1234 = vpop.f32.mrb[0].mxu0
        %1235 = vdwg.mxu0
        %v1236 = vsel %vm666, %v1233, -inf
        %1237 = vmax.xlane.f32.xlu0 %v1236
        %v1238 = vpop.xlane.xlu0 %1237
        %v1239 = vsub.f32 %v1233, %v1238
        %v1240 = vmul.f32 %v1239, 1.442695
        %v1241 = vpow.pop %v1240
        %v1242 = vsel %vm666, %v1241, 0.0
        %1243 = vadd.xlane.f32.xlu0 %v1242
        %v1244 = vpop.xlane.xlu0 %1243
        %1245 = vrot.lane.b32.xlu0 %v665, 104
        %v1246 = vpop.permute.xlu0 %1245
        %v1249 = vsel %vm666, %v1241, 0
        %1251 = vmatprep.subr.mxu0 0.0
        %1252 = vmatpush1.msra.mxu0 %v1246
        %1253 = vmatprep.subr.mxu0 0.0
        %1254 = vmatpush1.msra.mxu0 0.0
        %1255 = vmatprep.subr.mxu0 0.0
        %1256 = vmatpush1.msra.mxu0 0.0
        %1257 = vmatprep.subr.mxu0 0.0
        %1258 = vmatpush1.msra.mxu0 0.0
        %1259 = vmatprep.subr.mxu0 0.0
        %1260 = vmatpush1.msra.mxu0 0.0
        %1261 = vmatprep.subr.mxu0 0.0
        %1262 = vmatpush1.msra.mxu0 0.0
        %1263 = vmatprep.subr.mxu0 0.0
        %1264 = vmatpush1.msra.mxu0 0.0
        %1265 = vmatprep.subr.mxu0 0.0
        %1266 = vmatpush1.msra.mxu0 0.0
        %1267 = vmatprep.subr.mxu0 0.0
        %1268 = vmatpush1.msra.mxu0 0.0
        %1269 = vmatprep.subr.mxu0 0.0
        %1270 = vmatpush1.msra.mxu0 0.0
        %1271 = vmatprep.subr.mxu0 0.0
        %1272 = vmatpush1.msra.mxu0 0.0
        %1273 = vmatprep.subr.mxu0 0.0
        %1274 = vmatpush1.msra.mxu0 0.0
        %1275 = vmatprep.subr.mxu0 0.0
        %1276 = vmatpush1.msra.mxu0 0.0
        %1277 = vmatprep.subr.mxu0 0.0
        %1278 = vmatpush1.msra.mxu0 0.0
        %1279 = vmatprep.subr.mxu0 0.0
        %1280 = vmatpush1.msra.mxu0 0.0
        %1281 = vmatprep.subr.mxu0 0.0
        %1282 = vmatpush1.msra.mxu0 0.0
        %1283 = vmatprep.subr.mxu0 0.0
        %1284 = vmatpush1.msra.mxu0 0.0
        %1285 = vmatprep.subr.mxu0 0.0
        %1286 = vmatpush1.msra.mxu0 0.0
        %1287 = vmatprep.subr.mxu0 0.0
        %1288 = vmatpush1.msra.mxu0 0.0
        %1289 = vmatprep.subr.mxu0 0.0
        %1290 = vmatpush1.msra.mxu0 0.0
        %1291 = vmatprep.subr.mxu0 0.0
        %1292 = vmatpush1.msra.mxu0 0.0
        %1293 = vmatprep.subr.mxu0 0.0
        %1294 = vmatpush1.msra.mxu0 0.0
        %1295 = vmatprep.subr.mxu0 0.0
        %1296 = vmatpush1.msra.mxu0 0.0
        %1297 = vmatprep.subr.mxu0 0.0
        %1298 = vmatpush1.msra.mxu0 0.0
        %1299 = vmatprep.subr.mxu0 0.0
        %1300 = vmatpush1.msra.mxu0 0.0
        %1301 = vmatprep.subr.mxu0 0.0
        %1302 = vmatpush1.msra.mxu0 0.0
        %1303 = vmatprep.subr.mxu0 0.0
        %1304 = vmatpush1.msra.mxu0 0.0
        %1305 = vmatprep.subr.mxu0 0.0
        %1306 = vmatpush1.msra.mxu0 0.0
        %1307 = vmatprep.subr.mxu0 0.0
        %1308 = vmatpush1.msra.mxu0 0.0
        %1309 = vmatprep.subr.mxu0 0.0
        %1310 = vmatpush1.msra.mxu0 0.0
        %1311 = vmatprep.subr.mxu0 0.0
        %1312 = vmatpush1.msra.mxu0 0.0
        %1313 = vmatprep.subr.mxu0 0.0
        %1314 = vmatpush1.msra.mxu0 0.0
        %1315 = vmatprep.mubr.f32.mxu0 0.0
        %1316 = vmatmul.mubr.f32.gmra.mrb[0].mxu0 %v1249
        %v1317 = vpop.f32.mrb[0].mxu0
        %v1318 = vadd.f32 0.0, %v1317
        %v1319 = vpop.f32.mrb[0].mxu0
        %1320 = vdwg.mxu0
        %v1321 = vrcp.pop %v1244
        %v1322 = vmul.f32 %v1318, %v1321
        %1324 = vrot.lane.b32.xlu0 %v992, 8
        %v1325 = vpop.permute.xlu0 %1324
        %1328 = vrot.lane.b32.xlu0 %v1157, 16
        %v1329 = vpop.permute.xlu0 %1328
        %1332 = vrot.lane.b32.xlu0 %v1322, 24
        %v1333 = vpop.permute.xlu0 %1332
        %v1335 = vsel %vm666, %v826, %v1325
        %vm1336 = vcmask 130048
        %v1337 = vsel %vm1336, %v1335, %v1329
        %vm1338 = vcmask 195584
        %v1339 = vsel %vm1338, %v1337, %v1333
        %v1340 = vld [vmem:[#allocation12] sm:$0xff]
        %v1341 = vld [vmem:[#allocation12 + $0x8] sm:$0xff]
        %v1342 = vld [vmem:[#allocation12 + $0x10] sm:$0xff]
        %v1343 = vld [vmem:[#allocation12 + $0x18] sm:$0xff]
        %v1344 = vld [vmem:[%s6] sm:$0x1]
        %v1346 = vlaneseq
        %v1347 = vshrl.u32 %v1346, 7
        %v1348 = vsub.s32 0, %v1347
        %v1349 = vrot.slane %v1344, %v1348
        %v1352 = vsel %vm589, %v1339, 0
        %1354 = vmatprep.subr.mxu0 0.0
        %1355 = vmatpush1.msra.mxu0 %v1340
        %1356 = vmatprep.subr.mxu0 0.0
        %1357 = vmatpush1.msra.mxu0 %v1341
        %1358 = vmatprep.subr.mxu0 0.0
        %1359 = vmatpush1.msra.mxu0 %v1342
        %1360 = vmatprep.subr.mxu0 0.0
        %1361 = vmatpush1.msra.mxu0 %v1343
        %1362 = vmatprep.subr.mxu0 0.0
        %1363 = vmatpush1.msra.mxu0 0.0
        %1364 = vmatprep.subr.mxu0 0.0
        %1365 = vmatpush1.msra.mxu0 0.0
        %1366 = vmatprep.subr.mxu0 0.0
        %1367 = vmatpush1.msra.mxu0 0.0
        %1368 = vmatprep.subr.mxu0 0.0
        %1369 = vmatpush1.msra.mxu0 0.0
        %1370 = vmatprep.subr.mxu0 0.0
        %1371 = vmatpush1.msra.mxu0 0.0
        %1372 = vmatprep.subr.mxu0 0.0
        %1373 = vmatpush1.msra.mxu0 0.0
        %1374 = vmatprep.subr.mxu0 0.0
        %1375 = vmatpush1.msra.mxu0 0.0
        %1376 = vmatprep.subr.mxu0 0.0
        %1377 = vmatpush1.msra.mxu0 0.0
        %1378 = vmatprep.subr.mxu0 0.0
        %1379 = vmatpush1.msra.mxu0 0.0
        %1380 = vmatprep.subr.mxu0 0.0
        %1381 = vmatpush1.msra.mxu0 0.0
        %1382 = vmatprep.subr.mxu0 0.0
        %1383 = vmatpush1.msra.mxu0 0.0
        %1384 = vmatprep.subr.mxu0 0.0
        %1385 = vmatpush1.msra.mxu0 0.0
        %1386 = vmatprep.subr.mxu0 0.0
        %1387 = vmatpush1.msra.mxu0 0.0
        %1388 = vmatprep.subr.mxu0 0.0
        %1389 = vmatpush1.msra.mxu0 0.0
        %1390 = vmatprep.subr.mxu0 0.0
        %1391 = vmatpush1.msra.mxu0 0.0
        %1392 = vmatprep.subr.mxu0 0.0
        %1393 = vmatpush1.msra.mxu0 0.0
        %1394 = vmatprep.subr.mxu0 0.0
        %1395 = vmatpush1.msra.mxu0 0.0
        %1396 = vmatprep.subr.mxu0 0.0
        %1397 = vmatpush1.msra.mxu0 0.0
        %1398 = vmatprep.subr.mxu0 0.0
        %1399 = vmatpush1.msra.mxu0 0.0
        %1400 = vmatprep.subr.mxu0 0.0
        %1401 = vmatpush1.msra.mxu0 0.0
        %1402 = vmatprep.subr.mxu0 0.0
        %1403 = vmatpush1.msra.mxu0 0.0
        %1404 = vmatprep.subr.mxu0 0.0
        %1405 = vmatpush1.msra.mxu0 0.0
        %1406 = vmatprep.subr.mxu0 0.0
        %1407 = vmatpush1.msra.mxu0 0.0
        %1408 = vmatprep.subr.mxu0 0.0
        %1409 = vmatpush1.msra.mxu0 0.0
        %1410 = vmatprep.subr.mxu0 0.0
        %1411 = vmatpush1.msra.mxu0 0.0
        %1412 = vmatprep.subr.mxu0 0.0
        %1413 = vmatpush1.msra.mxu0 0.0
        %1414 = vmatprep.subr.mxu0 0.0
        %1415 = vmatpush1.msra.mxu0 0.0
        %1416 = vmatprep.subr.mxu0 0.0
        %1417 = vmatpush1.msra.mxu0 0.0
        %1418 = vmatprep.mubr.f32.mxu0 0.0
        %1419 = vmatmul.mubr.f32.gmra.mrb[0].mxu0 %v1352
        %v1420 = vpop.f32.mrb[0].mxu0
        %v1421 = vadd.f32 %v1349, %v1420
        %v1422 = vpop.f32.mrb[0].mxu0
        %1423 = vdwg.mxu0
        %1424 = vst.msk [vmem:[%s410] sm:$0xff] %vm589, %v1421
        %s1425 = sand.u32 %s214, 1
        %s1426 = scalar_lea.sflag [#allocation6], %s1425
        %s1427 = sand.u32 %s214, 1
        %s1428 = smul.addr %s1427, 8
        %s1429 = scalar_lea.vmem [#allocation13], %s1428
        // Predicated region
        $region73: #{tpu_custom_call.1} parent=47 // pred_check
          %p1430 = pneg %p224
        $region74: #{tpu_custom_call.1} parent=47 // pred_check_branch
          %1432 = sbr.rel (%p1430) target = $region76
        $region75: #{tpu_custom_call.1} parent=47 // pred_region
          %s1434 = ssub.s32 128, 128
          %1435 = vsyncadd %s1426, %s1434
          %s1436 = sadd.s32 %s33, %s32
          %s1437 = smul.addr %s1436, 128
          %s1438 = scalar_lea.hbm %s7, %s1437
          %s1440 = sshll.u32 %s1429, 4
          %s1441 = int_to_ptr.vmem [resolvable:$true] %s1440
          %1443 = dma.vmem_to_hbm [thread:$0]  %s1441, 128, %s1438, %s1426
        $region76: #{tpu_custom_call.1} parent=47 // pred_fallthru
          _
      $region48: #{tpu_custom_call.1} parent=5 // pred_fallthru
        _
      %p1444 = scmp.le.s32.totalorder 2, %s23
      // Predicated region
      $region77: #{tpu_custom_call.1} parent=5 // pred_check
        %p1445 = pneg %p1444
      $region78: #{tpu_custom_call.1} parent=5 // pred_check_branch
        %1447 = sbr.rel (%p1445) target = $region80
      $region79: #{tpu_custom_call.1} parent=5 // pred_region
        %s1448 = ssub.s32 %s23, 2
        // Predicated region
        $region81: #{tpu_custom_call.1} parent=79 // pred_check
          %p1449 = pneg %p230
        $region82: #{tpu_custom_call.1} parent=79 // pred_check_branch
          %1451 = sbr.rel (%p1449) target = $region84
        $region83: #{tpu_custom_call.1} parent=79 // pred_region
          %s1452 = sand.u32 %s215, 1
          %s1453 = scalar_lea.sflag [#allocation6], %s1452
          %s1454 = sand.u32 %s215, 1
          %s1455 = smul.addr %s1454, 8
          %s1456 = scalar_lea.vmem [#allocation13], %s1455
          %1457 = dma.done %s1453, 128
        $region84: #{tpu_custom_call.1} parent=79 // pred_fallthru
          _
      $region80: #{tpu_custom_call.1} parent=5 // pred_fallthru
        _
    $region6: #{tpu_custom_call.1} parent=1 // loop_footer
      %s27 = sadd.s32 1, %s23
    $region7: #{tpu_custom_call.1} parent=1 // loop_footer_branch
      %22 = sbr.rel target = $region3
    $region8: #{tpu_custom_call.1} parent=1 // loop_exit
      _
    %1458 = vsyncpa [#allocation5], 1
    %s1459 = scalar_lea.sflag [#allocation5], 1
    %1460 = vsyncpa %s1459, 1
    %1461 = vsyncpa [#allocation8], 1
    %s1462 = scalar_lea.sflag [#allocation8], 1
    %1463 = vsyncpa %s1462, 1
    %1464 = vsyncpa [#allocation11], 1
    %1465 = vsyncpa [#allocation6], 1
    %s1466 = scalar_lea.sflag [#allocation6], 1
    %1467 = vsyncpa %s1466, 1

</llo_original>
